<compile_context>
chip_gen: v7x
topology: tpu7x:2x2x1
jax: 0.10.0
libtpu: 0.0.40
codegen_flags: <defaults>
</compile_context>

<pallas_src>
import math
from functools import partial

import jax
import jax.numpy as jnp
import numpy as np
from jax import lax
from jax.experimental import pallas as pl
from jax.experimental.pallas import tpu as pltpu

EPS = 1e-6


def _layernorm(x, w, b):
    # x: (S, H), w/b broadcastable (1, H); biased variance, eps=1e-6 (nn.LayerNorm)
    mu = jnp.mean(x, axis=-1, keepdims=True)
    var = jnp.mean((x - mu) ** 2, axis=-1, keepdims=True)
    return (x - mu) * lax.rsqrt(var + EPS) * w + b


def _gelu_exact(x):
    # nn.GELU() default: exact erf formulation
    return 0.5 * x * (1.0 + lax.erf(x * (1.0 / math.sqrt(2.0))))


def _encoder_kernel(num_heads, compute_dtype, approx_recip,
                    x_ref, pos_ref,
                    ln1w_ref, ln1b_ref, inw_ref, inb_ref, outw_ref, outb_ref,
                    ln2w_ref, ln2b_ref, w1_ref, b1_ref, w2_ref, b2_ref,
                    lnfw_ref, lnfb_ref,
                    o_ref, xres_ref):
    """One (batch element, layer) grid step.  Residual stream lives in xres_ref."""
    li = pl.program_id(1)
    n_layers = pl.num_programs(1)

    @pl.when(li == 0)
    def _():
        # Add the positional embedding once, at the first layer step.
        xres_ref[...] = x_ref[0] + pos_ref[...]

    x = xres_ref[...]                                  # (S, H) f32 residual carry
    S, H = x.shape
    hd = H // num_heads

    # ---- self-attention sub-block (pre-LN) ----
    h = _layernorm(x, ln1w_ref[0], ln1b_ref[0])
    qkv = jnp.dot(h.astype(compute_dtype), inw_ref[0],
                  preferred_element_type=jnp.float32) + inb_ref[0]   # (S, 3H) f32
    # (softmax scale 1/sqrt(hd) is pre-folded into the Q weights/bias host-side)
    q = jnp.transpose(qkv[:, 0 * H:1 * H].reshape(S, num_heads, hd), (1, 0, 2))
    k = jnp.transpose(qkv[:, 1 * H:2 * H].reshape(S, num_heads, hd), (1, 0, 2))
    v = jnp.transpose(qkv[:, 2 * H:3 * H].reshape(S, num_heads, hd), (1, 0, 2))

    s = jnp.einsum("nqd,nkd->nqk",
                   q.astype(compute_dtype), k.astype(compute_dtype),
                   preferred_element_type=jnp.float32)               # (nh, S, S)
    s = s - jnp.max(s, axis=-1, keepdims=True)
    p = jnp.exp(s)
    p = p * pl.reciprocal(jnp.sum(p, axis=-1, keepdims=True), approx=approx_recip)
    ao = jnp.einsum("nqk,nkd->nqd",
                    p.astype(compute_dtype), v.astype(compute_dtype),
                    preferred_element_type=jnp.float32)              # (nh, S, hd)
    attn = jnp.transpose(ao, (1, 0, 2)).reshape(S, H)
    attn = jnp.dot(attn.astype(compute_dtype), outw_ref[0],
                   preferred_element_type=jnp.float32) + outb_ref[0]

    x = x + attn                                       # residual 1

    # ---- MLP sub-block (pre-LN) ----
    y = _layernorm(x, ln2w_ref[0], ln2b_ref[0])
    y = jnp.dot(y.astype(compute_dtype), w1_ref[0],
                preferred_element_type=jnp.float32) + b1_ref[0]
    y = _gelu_exact(y)
    y = jnp.dot(y.astype(compute_dtype), w2_ref[0],
                preferred_element_type=jnp.float32) + b2_ref[0]

    x = x + y                                          # residual 2
    xres_ref[...] = x

    @pl.when(li == n_layers - 1)
    def _():
        # Final encoder LayerNorm, fused into the last layer step.
        o_ref[0] = _layernorm(x, lnfw_ref[...], lnfb_ref[...]).astype(o_ref.dtype)


def encoder_forward(x_sbh, params, *, num_layers, num_heads,
                    compute_dtype=jnp.bfloat16):
    """x_sbh: (S, B, H) float32 (PyTorch seq-first convention).  Returns (S, B, H)."""
    S, B, H = x_sbh.shape
    L = num_layers
    M = params["w1"].shape[1]
    hd = H // num_heads
    scale = 1.0 / math.sqrt(hd)
    approx_recip = jnp.dtype(compute_dtype) != jnp.dtype(jnp.float32)

    x_bsh = jnp.transpose(x_sbh, (1, 0, 2))            # -> (B, S, H)
    pos = params["pos"].reshape(S, H)                  # (S, 1, H) -> (S, H), f32

    # Fold the softmax scale into the Q slice of the attention in-projection.
    in_w = params["in_w"].at[:, :H, :].multiply(scale)         # (L, 3H, H)
    in_b = params["in_b"].at[:, :H].multiply(scale)            # (L, 3H)

    # Pre-transpose weight slabs to (in_dim, out_dim) and cast to compute dtype.
    wt = lambda w: jnp.transpose(w, (0, 2, 1)).astype(compute_dtype)
    in_w_t = wt(in_w)                   # (L, H, 3H)
    out_w_t = wt(params["out_w"])       # (L, H, H)
    w1_t = wt(params["w1"])             # (L, H, M)
    w2_t = wt(params["w2"])             # (L, M, H)

    # Biases / LN params stay f32; reshape to (L, 1, X) for clean per-layer blocks.
    r3 = lambda a: a.reshape(L, 1, a.shape[-1]).astype(jnp.float32)
    ln1_w, ln1_b = r3(params["ln1_w"]), r3(params["ln1_b"])
    ln2_w, ln2_b = r3(params["ln2_w"]), r3(params["ln2_b"])
    in_b3, out_b3 = r3(in_b), r3(params["out_b"])
    b1_3, b2_3 = r3(params["b1"]), r3(params["b2"])

    per_layer = lambda shape: pl.BlockSpec(shape, lambda b, l: (l, 0, 0))
    const = lambda shape: pl.BlockSpec(shape, lambda b, l: (0,) * len(shape))

    # Explicit VMEM budget: one layer's (double-buffered) weights + activations,
    # with headroom; clamped so it is valid on v7x (64 MiB) and v5e/v6e (128 MiB).
    itemsize = jnp.dtype(compute_dtype).itemsize
    wbytes = (4 * H * H + 2 * H * M) * itemsize              # one layer's weights
    abytes = 4 * (12 * S * H + 2 * num_heads * S * S + 2 * S * M)
    vmem_limit = int(min(56 * 2**20, max(32 * 2**20, 2.5 * (2 * wbytes + abytes))))

    kernel = partial(_encoder_kernel, num_heads, compute_dtype, approx_recip)
    out = pl.pallas_call(
        kernel,
        out_shape=jax.ShapeDtypeStruct((B, S, H), jnp.float32),
        grid_spec=pltpu.PrefetchScalarGridSpec(
            num_scalar_prefetch=0,
            grid=(B, L),                                        # L innermost
            in_specs=[
                pl.BlockSpec((1, S, H), lambda b, l: (b, 0, 0)),   # x
                const((S, H)),                                     # pos
                per_layer((1, 1, H)), per_layer((1, 1, H)),        # ln1 w, b
                per_layer((1, H, 3 * H)), per_layer((1, 1, 3 * H)),  # in_proj w, b
                per_layer((1, H, H)), per_layer((1, 1, H)),        # out_proj w, b
                per_layer((1, 1, H)), per_layer((1, 1, H)),        # ln2 w, b
                per_layer((1, H, M)), per_layer((1, 1, M)),        # mlp linear1
                per_layer((1, M, H)), per_layer((1, 1, H)),        # mlp linear2
                const((1, H)), const((1, H)),                      # final ln w, b
            ],
            out_specs=pl.BlockSpec((1, S, H), lambda b, l: (b, 0, 0)),
            scratch_shapes=[pltpu.VMEM((S, H), jnp.float32)],      # residual carry
        ),
        compiler_params=pltpu.CompilerParams(
            dimension_semantics=("parallel", "arbitrary"),
            vmem_limit_bytes=vmem_limit,
        ),
    )(
        x_bsh, pos,
        ln1_w, ln1_b, in_w_t, in_b3, out_w_t, out_b3,
        ln2_w, ln2_b, w1_t, b1_3, w2_t, b2_3,
        params["lnf_w"], params["lnf_b"],
    )
    return jnp.transpose(out, (1, 0, 2))               # back to (S, B, H)


def make_params(key, *, seq_len, num_layers, hidden, mlp):
    """Deterministic synthetic parameters (shapes match the PyTorch module)."""
    ks = jax.random.split(key, 16)
    L, H, M, S = num_layers, hidden, mlp, seq_len
    n = lambda k, shape, std: (jax.random.normal(k, shape, jnp.float32) * std)
    return {
        "pos":   n(ks[0], (S, 1, H), 0.02),
        "ln1_w": jnp.ones((L, H), jnp.float32),
        "ln1_b": jnp.zeros((L, H), jnp.float32),
        "in_w":  n(ks[1], (L, 3 * H, H), 1.0 / math.sqrt(H)),
        "in_b":  n(ks[2], (L, 3 * H), 1e-3),
        "out_w": n(ks[3], (L, H, H), 1.0 / math.sqrt(H)),
        "out_b": n(ks[4], (L, H), 1e-3),
        "ln2_w": jnp.ones((L, H), jnp.float32),
        "ln2_b": jnp.zeros((L, H), jnp.float32),
        "w1":    n(ks[5], (L, M, H), 1.0 / math.sqrt(H)),
        "b1":    n(ks[6], (L, M), 1e-6),
        "w2":    n(ks[7], (L, H, M), 1.0 / math.sqrt(M)),
        "b2":    n(ks[8], (L, H), 1e-6),
        "lnf_w": jnp.ones((1, H), jnp.float32),
        "lnf_b": jnp.zeros((1, H), jnp.float32),
    }


def encoder_reference(x_sbh, params, *, num_layers, num_heads):
    """Pure-JAX f32 reference mirroring the PyTorch forward (eval mode)."""
    S, B, H = x_sbh.shape
    hd = H // num_heads

    def ln(x, w, b):
        mu = jnp.mean(x, axis=-1, keepdims=True)
        var = jnp.mean((x - mu) ** 2, axis=-1, keepdims=True)
        return (x - mu) / jnp.sqrt(var + EPS) * w + b

    x = x_sbh + params["pos"]
    for li in range(num_layers):
        h = ln(x, params["ln1_w"][li], params["ln1_b"][li])
        qkv = jnp.einsum("sbh,oh->sbo", h, params["in_w"][li]) + params["in_b"][li]
        q, k, v = jnp.split(qkv, 3, axis=-1)
        q = q.reshape(S, B, num_heads, hd) / math.sqrt(hd)
        k = k.reshape(S, B, num_heads, hd)
        v = v.reshape(S, B, num_heads, hd)
        s = jnp.einsum("qbnd,kbnd->bnqk", q, k)
        p = jax.nn.softmax(s, axis=-1)
        a = jnp.einsum("bnqk,kbnd->qbnd", p, v).reshape(S, B, H)
        a = jnp.einsum("sbh,oh->sbo", a, params["out_w"][li]) + params["out_b"][li]
        x = x + a
        y = ln(x, params["ln2_w"][li], params["ln2_b"][li])
        y = jnp.einsum("sbh,mh->sbm", y, params["w1"][li]) + params["b1"][li]
        y = 0.5 * y * (1.0 + lax.erf(y / math.sqrt(2.0)))
        y = jnp.einsum("sbm,hm->sbh", y, params["w2"][li]) + params["b2"][li]
        x = x + y
    return ln(x, params["lnf_w"][0], params["lnf_b"][0])


if __name__ == "__main__":
    SEQ, BATCH, HIDDEN, MLP, LAYERS, HEADS = 8, 2, 32, 64, 2, 4

    key = jax.random.PRNGKey(0)
    kx, kp = jax.random.split(key)
    x = jax.random.normal(kx, (SEQ, BATCH, HIDDEN), jnp.float32)  # (S, B, H)
    params = make_params(kp, seq_len=SEQ, num_layers=LAYERS, hidden=HIDDEN, mlp=MLP)

    ref = encoder_reference(x, params, num_layers=LAYERS, num_heads=HEADS)

    # Strict numerical check: f32 matmul path (exact reciprocal) vs f32 reference.
    out_f32 = encoder_forward(x, params, num_layers=LAYERS, num_heads=HEADS,
                              compute_dtype=jnp.float32)
    out_f32 = jax.block_until_ready(out_f32)
    np.testing.assert_allclose(np.asarray(out_f32), np.asarray(ref),
                               rtol=2e-3, atol=2e-3)

    # Production path: bf16 matmul inputs / f32 accumulation (loose tolerance).
    out_bf16 = encoder_forward(x, params, num_layers=LAYERS, num_heads=HEADS,
                               compute_dtype=jnp.bfloat16)
    out_bf16 = jax.block_until_ready(out_bf16)
    np.testing.assert_allclose(np.asarray(out_bf16), np.asarray(ref),
                               rtol=1e-1, atol=1e-1)

    print("KERNEL_OK")
</pallas_src>

<mosaic_0001>
module attributes {stable_mosaic.version = 11 : i64} {
  func.func @_encoder_kernel(%arg0: i32, %arg1: i32, %arg2: memref<1x8x32xf32, #tpu.memory_space<vmem>>, %arg3: memref<8x32xf32, #tpu.memory_space<vmem>>, %arg4: memref<1x1x32xf32, #tpu.memory_space<vmem>>, %arg5: memref<1x1x32xf32, #tpu.memory_space<vmem>>, %arg6: memref<1x32x96xf32, #tpu.memory_space<vmem>>, %arg7: memref<1x1x96xf32, #tpu.memory_space<vmem>>, %arg8: memref<1x32x32xf32, #tpu.memory_space<vmem>>, %arg9: memref<1x1x32xf32, #tpu.memory_space<vmem>>, %arg10: memref<1x1x32xf32, #tpu.memory_space<vmem>>, %arg11: memref<1x1x32xf32, #tpu.memory_space<vmem>>, %arg12: memref<1x32x64xf32, #tpu.memory_space<vmem>>, %arg13: memref<1x1x64xf32, #tpu.memory_space<vmem>>, %arg14: memref<1x64x32xf32, #tpu.memory_space<vmem>>, %arg15: memref<1x1x32xf32, #tpu.memory_space<vmem>>, %arg16: memref<1x32xf32, #tpu.memory_space<vmem>>, %arg17: memref<1x32xf32, #tpu.memory_space<vmem>>, %arg18: memref<1x8x32xf32, #tpu.memory_space<vmem>>, %arg19: memref<8x32xf32, #tpu.memory_space<vmem>>) attributes {dimension_semantics = [#tpu.dimension_semantics<parallel>, #tpu.dimension_semantics<arbitrary>], iteration_bounds = array<i64: 2, 2>, scalar_prefetch = 0 : i64, scratch_operands = 1 : i64, tpu.core_type = #tpu.core_type<tc>, window_params = [{transform_indices = @transform_0, window_bounds = array<i64: 1, 8, 32>}, {pipeline_mode = #tpu.pipeline_mode<synchronous>, transform_indices = @transform_1, window_bounds = array<i64: 8, 32>}, {transform_indices = @transform_2, window_bounds = array<i64: 1, 1, 32>}, {transform_indices = @transform_3, window_bounds = array<i64: 1, 1, 32>}, {transform_indices = @transform_4, window_bounds = array<i64: 1, 32, 96>}, {transform_indices = @transform_5, window_bounds = array<i64: 1, 1, 96>}, {transform_indices = @transform_6, window_bounds = array<i64: 1, 32, 32>}, {transform_indices = @transform_7, window_bounds = array<i64: 1, 1, 32>}, {transform_indices = @transform_8, window_bounds = array<i64: 1, 1, 32>}, {transform_indices = @transform_9, window_bounds = array<i64: 1, 1, 32>}, {transform_indices = @transform_10, window_bounds = array<i64: 1, 32, 64>}, {transform_indices = @transform_11, window_bounds = array<i64: 1, 1, 64>}, {transform_indices = @transform_12, window_bounds = array<i64: 1, 64, 32>}, {transform_indices = @transform_13, window_bounds = array<i64: 1, 1, 32>}, {pipeline_mode = #tpu.pipeline_mode<synchronous>, transform_indices = @transform_14, window_bounds = array<i64: 1, 32>}, {pipeline_mode = #tpu.pipeline_mode<synchronous>, transform_indices = @transform_15, window_bounds = array<i64: 1, 32>}, {transform_indices = @transform_16, window_bounds = array<i64: 1, 8, 32>}]} {
    %c0_i32 = arith.constant 0 : i32
    %0 = arith.cmpi eq, %arg1, %c0_i32 : i32
    %1 = arith.extui %0 : i1 to i32
    %c0_i32_0 = arith.constant 0 : i32
    %2 = arith.cmpi ne, %1, %c0_i32_0 : i32
    scf.if %2 {
      %c0_61 = arith.constant 0 : index
      %c0_62 = arith.constant 0 : index
      %c0_63 = arith.constant 0 : index
      %121 = vector.load %arg2[%c0_61, %c0_62, %c0_63] : memref<1x8x32xf32, #tpu.memory_space<vmem>>, vector<1x8x32xf32>
      %122 = vector.shape_cast %121 : vector<1x8x32xf32> to vector<8x32xf32>
      %c0_64 = arith.constant 0 : index
      %c0_65 = arith.constant 0 : index
      %123 = vector.load %arg3[%c0_64, %c0_65] : memref<8x32xf32, #tpu.memory_space<vmem>>, vector<8x32xf32>
      %124 = arith.addf %122, %123 : vector<8x32xf32>
      %c0_66 = arith.constant 0 : index
      %c0_67 = arith.constant 0 : index
      %125 = vector.load %arg19[%c0_66, %c0_67] : memref<8x32xf32, #tpu.memory_space<vmem>>, vector<8x32xf32>
      tpu.vector_store %arg19[%c0_66, %c0_67], %124 {strides = array<i32>} : memref<8x32xf32, #tpu.memory_space<vmem>>, vector<8x32xf32>,
    } else {
    }
    %c0 = arith.constant 0 : index
    %c0_1 = arith.constant 0 : index
    %3 = vector.load %arg19[%c0, %c0_1] : memref<8x32xf32, #tpu.memory_space<vmem>>, vector<8x32xf32>
    %c0_2 = arith.constant 0 : index
    %c0_3 = arith.constant 0 : index
    %c0_4 = arith.constant 0 : index
    %4 = vector.load %arg4[%c0_2, %c0_3, %c0_4] : memref<1x1x32xf32, #tpu.memory_space<vmem>>, vector<1x1x32xf32>
    %5 = vector.shape_cast %4 : vector<1x1x32xf32> to vector<1x32xf32>
    %c0_5 = arith.constant 0 : index
    %c0_6 = arith.constant 0 : index
    %c0_7 = arith.constant 0 : index
    %6 = vector.load %arg5[%c0_5, %c0_6, %c0_7] : memref<1x1x32xf32, #tpu.memory_space<vmem>>, vector<1x1x32xf32>
    %7 = vector.shape_cast %6 : vector<1x1x32xf32> to vector<1x32xf32>
    %cst = arith.constant dense<0.000000e+00> : vector<8xf32>
    %8 = vector.multi_reduction <add>, %3, %cst [1] : vector<8x32xf32> to vector<8xf32>
    %9 = vector.shape_cast %8 : vector<8xf32> to vector<8x1xf32>
    %cst_8 = arith.constant 3.200000e+01 : f32
    %10 = vector.broadcast %cst_8 : f32 to vector<8x1xf32>
    %11 = arith.divf %9, %10 : vector<8x1xf32>
    %12 = vector.broadcast %11 : vector<8x1xf32> to vector<8x32xf32>
    %13 = arith.subf %3, %12 : vector<8x32xf32>
    %14 = arith.mulf %13, %13 : vector<8x32xf32>
    %cst_9 = arith.constant dense<0.000000e+00> : vector<8xf32>
    %15 = vector.multi_reduction <add>, %14, %cst_9 [1] : vector<8x32xf32> to vector<8xf32>
    %16 = vector.shape_cast %15 : vector<8xf32> to vector<8x1xf32>
    %cst_10 = arith.constant 3.200000e+01 : f32
    %17 = vector.broadcast %cst_10 : f32 to vector<8x1xf32>
    %18 = arith.divf %16, %17 : vector<8x1xf32>
    %19 = vector.broadcast %11 : vector<8x1xf32> to vector<8x32xf32>
    %20 = arith.subf %3, %19 : vector<8x32xf32>
    %cst_11 = arith.constant 9.99999997E-7 : f32
    %21 = vector.broadcast %cst_11 : f32 to vector<8x1xf32>
    %22 = arith.addf %18, %21 : vector<8x1xf32>
    %23 = math.rsqrt %22 : vector<8x1xf32>
    %24 = vector.broadcast %23 : vector<8x1xf32> to vector<8x32xf32>
    %25 = arith.mulf %20, %24 : vector<8x32xf32>
    %26 = vector.broadcast %5 : vector<1x32xf32> to vector<8x32xf32>
    %27 = arith.mulf %25, %26 : vector<8x32xf32>
    %28 = vector.broadcast %7 : vector<1x32xf32> to vector<8x32xf32>
    %29 = arith.addf %27, %28 : vector<8x32xf32>
    %c0_12 = arith.constant 0 : index
    %c0_13 = arith.constant 0 : index
    %c0_14 = arith.constant 0 : index
    %30 = vector.load %arg6[%c0_12, %c0_13, %c0_14] : memref<1x32x96xf32, #tpu.memory_space<vmem>>, vector<1x32x96xf32>
    %31 = vector.shape_cast %30 : vector<1x32x96xf32> to vector<32x96xf32>
    %cst_15 = arith.constant dense<0.000000e+00> : vector<8x96xf32>
    %32 = tpu.matmul %29, %31, %cst_15 {dimension_numbers = #tpu.dot_dimension_numbers<[1], [0], [0], [1], [0, 0, 1, 1], [], []>} : vector<8x32xf32>, vector<32x96xf32>, vector<8x96xf32> -> vector<8x96xf32>
    %c0_16 = arith.constant 0 : index
    %c0_17 = arith.constant 0 : index
    %c0_18 = arith.constant 0 : index
    %33 = vector.load %arg7[%c0_16, %c0_17, %c0_18] : memref<1x1x96xf32, #tpu.memory_space<vmem>>, vector<1x1x96xf32>
    %34 = vector.shape_cast %33 : vector<1x1x96xf32> to vector<1x96xf32>
    %35 = vector.broadcast %34 : vector<1x96xf32> to vector<8x96xf32>
    %36 = arith.addf %32, %35 : vector<8x96xf32>
    %37 = vector.extract_strided_slice %36 {offsets = [0, 0], sizes = [8, 32], strides = [1, 1]} : vector<8x96xf32> to vector<8x32xf32>
    %38 = vector.shape_cast %37 : vector<8x32xf32> to vector<8x4x8xf32>
    %39 = tpu.transpose %38, [1, 0, 2] : vector<8x4x8xf32> -> vector<4x8x8xf32>
    %40 = vector.extract_strided_slice %36 {offsets = [0, 32], sizes = [8, 32], strides = [1, 1]} : vector<8x96xf32> to vector<8x32xf32>
    %41 = vector.shape_cast %40 : vector<8x32xf32> to vector<8x4x8xf32>
    %42 = tpu.transpose %41, [1, 0, 2] : vector<8x4x8xf32> -> vector<4x8x8xf32>
    %43 = vector.extract_strided_slice %36 {offsets = [0, 64], sizes = [8, 32], strides = [1, 1]} : vector<8x96xf32> to vector<8x32xf32>
    %44 = vector.shape_cast %43 : vector<8x32xf32> to vector<8x4x8xf32>
    %45 = tpu.transpose %44, [1, 0, 2] : vector<8x4x8xf32> -> vector<4x8x8xf32>
    "tpu.trace_start"() <{level = 10 : i32, message = "nqd,nkd->nqk"}> : () -> ()
    %cst_19 = arith.constant dense<0.000000e+00> : vector<4x8x8xf32>
    %46 = tpu.matmul %39, %42, %cst_19 {dimension_numbers = #tpu.dot_dimension_numbers<[2], [2], [1], [1], [0, 0, 0, 1, 1, 1], [0], [0]>} : vector<4x8x8xf32>, vector<4x8x8xf32>, vector<4x8x8xf32> -> vector<4x8x8xf32>
    "tpu.trace_stop"() : () -> ()
    %cst_20 = arith.constant dense<0xFF800000> : vector<4x8xf32>
    %47 = vector.multi_reduction <maximumf>, %46, %cst_20 [2] : vector<4x8x8xf32> to vector<4x8xf32>
    %48 = vector.shape_cast %47 : vector<4x8xf32> to vector<4x8x1xf32>
    %49 = vector.broadcast %48 : vector<4x8x1xf32> to vector<4x8x8xf32>
    %50 = arith.subf %46, %49 : vector<4x8x8xf32>
    %51 = math.exp %50 : vector<4x8x8xf32>
    %cst_21 = arith.constant dense<0.000000e+00> : vector<4x8xf32>
    %52 = vector.multi_reduction <add>, %51, %cst_21 [2] : vector<4x8x8xf32> to vector<4x8xf32>
    %53 = vector.shape_cast %52 : vector<4x8xf32> to vector<4x8x1xf32>
    %54 = tpu.reciprocal %53 : vector<4x8x1xf32> -> vector<4x8x1xf32>
    %55 = vector.broadcast %54 : vector<4x8x1xf32> to vector<4x8x8xf32>
    %56 = arith.mulf %51, %55 : vector<4x8x8xf32>
    "tpu.trace_start"() <{level = 10 : i32, message = "nqk,nkd->nqd"}> : () -> ()
    %cst_22 = arith.constant dense<0.000000e+00> : vector<4x8x8xf32>
    %57 = tpu.matmul %56, %45, %cst_22 {dimension_numbers = #tpu.dot_dimension_numbers<[2], [1], [1], [2], [0, 0, 0, 1, 1, 2], [0], [0]>} : vector<4x8x8xf32>, vector<4x8x8xf32>, vector<4x8x8xf32> -> vector<4x8x8xf32>
    "tpu.trace_stop"() : () -> ()
    %58 = tpu.transpose %57, [1, 0, 2] : vector<4x8x8xf32> -> vector<8x4x8xf32>
    %59 = vector.shape_cast %58 : vector<8x4x8xf32> to vector<8x32xf32>
    %c0_23 = arith.constant 0 : index
    %c0_24 = arith.constant 0 : index
    %c0_25 = arith.constant 0 : index
    %60 = vector.load %arg8[%c0_23, %c0_24, %c0_25] : memref<1x32x32xf32, #tpu.memory_space<vmem>>, vector<1x32x32xf32>
    %61 = vector.shape_cast %60 : vector<1x32x32xf32> to vector<32x32xf32>
    %cst_26 = arith.constant dense<0.000000e+00> : vector<8x32xf32>
    %62 = tpu.matmul %59, %61, %cst_26 {dimension_numbers = #tpu.dot_dimension_numbers<[1], [0], [0], [1], [0, 0, 1, 1], [], []>} : vector<8x32xf32>, vector<32x32xf32>, vector<8x32xf32> -> vector<8x32xf32>
    %c0_27 = arith.constant 0 : index
    %c0_28 = arith.constant 0 : index
    %c0_29 = arith.constant 0 : index
    %63 = vector.load %arg9[%c0_27, %c0_28, %c0_29] : memref<1x1x32xf32, #tpu.memory_space<vmem>>, vector<1x1x32xf32>
    %64 = vector.shape_cast %63 : vector<1x1x32xf32> to vector<1x32xf32>
    %65 = vector.broadcast %64 : vector<1x32xf32> to vector<8x32xf32>
    %66 = arith.addf %62, %65 : vector<8x32xf32>
    %67 = arith.addf %3, %66 : vector<8x32xf32>
    %c0_30 = arith.constant 0 : index
    %c0_31 = arith.constant 0 : index
    %c0_32 = arith.constant 0 : index
    %68 = vector.load %arg10[%c0_30, %c0_31, %c0_32] : memref<1x1x32xf32, #tpu.memory_space<vmem>>, vector<1x1x32xf32>
    %69 = vector.shape_cast %68 : vector<1x1x32xf32> to vector<1x32xf32>
    %c0_33 = arith.constant 0 : index
    %c0_34 = arith.constant 0 : index
    %c0_35 = arith.constant 0 : index
    %70 = vector.load %arg11[%c0_33, %c0_34, %c0_35] : memref<1x1x32xf32, #tpu.memory_space<vmem>>, vector<1x1x32xf32>
    %71 = vector.shape_cast %70 : vector<1x1x32xf32> to vector<1x32xf32>
    %cst_36 = arith.constant dense<0.000000e+00> : vector<8xf32>
    %72 = vector.multi_reduction <add>, %67, %cst_36 [1] : vector<8x32xf32> to vector<8xf32>
    %73 = vector.shape_cast %72 : vector<8xf32> to vector<8x1xf32>
    %cst_37 = arith.constant 3.200000e+01 : f32
    %74 = vector.broadcast %cst_37 : f32 to vector<8x1xf32>
    %75 = arith.divf %73, %74 : vector<8x1xf32>
    %76 = vector.broadcast %75 : vector<8x1xf32> to vector<8x32xf32>
    %77 = arith.subf %67, %76 : vector<8x32xf32>
    %78 = arith.mulf %77, %77 : vector<8x32xf32>
    %cst_38 = arith.constant dense<0.000000e+00> : vector<8xf32>
    %79 = vector.multi_reduction <add>, %78, %cst_38 [1] : vector<8x32xf32> to vector<8xf32>
    %80 = vector.shape_cast %79 : vector<8xf32> to vector<8x1xf32>
    %cst_39 = arith.constant 3.200000e+01 : f32
    %81 = vector.broadcast %cst_39 : f32 to vector<8x1xf32>
    %82 = arith.divf %80, %81 : vector<8x1xf32>
    %83 = vector.broadcast %75 : vector<8x1xf32> to vector<8x32xf32>
    %84 = arith.subf %67, %83 : vector<8x32xf32>
    %cst_40 = arith.constant 9.99999997E-7 : f32
    %85 = vector.broadcast %cst_40 : f32 to vector<8x1xf32>
    %86 = arith.addf %82, %85 : vector<8x1xf32>
    %87 = math.rsqrt %86 : vector<8x1xf32>
    %88 = vector.broadcast %87 : vector<8x1xf32> to vector<8x32xf32>
    %89 = arith.mulf %84, %88 : vector<8x32xf32>
    %90 = vector.broadcast %69 : vector<1x32xf32> to vector<8x32xf32>
    %91 = arith.mulf %89, %90 : vector<8x32xf32>
    %92 = vector.broadcast %71 : vector<1x32xf32> to vector<8x32xf32>
    %93 = arith.addf %91, %92 : vector<8x32xf32>
    %c0_41 = arith.constant 0 : index
    %c0_42 = arith.constant 0 : index
    %c0_43 = arith.constant 0 : index
    %94 = vector.load %arg12[%c0_41, %c0_42, %c0_43] : memref<1x32x64xf32, #tpu.memory_space<vmem>>, vector<1x32x64xf32>
    %95 = vector.shape_cast %94 : vector<1x32x64xf32> to vector<32x64xf32>
    %cst_44 = arith.constant dense<0.000000e+00> : vector<8x64xf32>
    %96 = tpu.matmul %93, %95, %cst_44 {dimension_numbers = #tpu.dot_dimension_numbers<[1], [0], [0], [1], [0, 0, 1, 1], [], []>} : vector<8x32xf32>, vector<32x64xf32>, vector<8x64xf32> -> vector<8x64xf32>
    %c0_45 = arith.constant 0 : index
    %c0_46 = arith.constant 0 : index
    %c0_47 = arith.constant 0 : index
    %97 = vector.load %arg13[%c0_45, %c0_46, %c0_47] : memref<1x1x64xf32, #tpu.memory_space<vmem>>, vector<1x1x64xf32>
    %98 = vector.shape_cast %97 : vector<1x1x64xf32> to vector<1x64xf32>
    %99 = vector.broadcast %98 : vector<1x64xf32> to vector<8x64xf32>
    %100 = arith.addf %96, %99 : vector<8x64xf32>
    %cst_48 = arith.constant 5.000000e-01 : f32
    %101 = vector.broadcast %cst_48 : f32 to vector<8x64xf32>
    %102 = arith.mulf %101, %100 : vector<8x64xf32>
    %cst_49 = arith.constant 0.707106769 : f32
    %103 = vector.broadcast %cst_49 : f32 to vector<8x64xf32>
    %104 = arith.mulf %100, %103 : vector<8x64xf32>
    %105 = math.erf %104 : vector<8x64xf32>
    %cst_50 = arith.constant 1.000000e+00 : f32
    %106 = vector.broadcast %cst_50 : f32 to vector<8x64xf32>
    %107 = arith.addf %106, %105 : vector<8x64xf32>
    %108 = arith.mulf %102, %107 : vector<8x64xf32>
    %c0_51 = arith.constant 0 : index
    %c0_52 = arith.constant 0 : index
    %c0_53 = arith.constant 0 : index
    %109 = vector.load %arg14[%c0_51, %c0_52, %c0_53] : memref<1x64x32xf32, #tpu.memory_space<vmem>>, vector<1x64x32xf32>
    %110 = vector.shape_cast %109 : vector<1x64x32xf32> to vector<64x32xf32>
    %cst_54 = arith.constant dense<0.000000e+00> : vector<8x32xf32>
    %111 = tpu.matmul %108, %110, %cst_54 {dimension_numbers = #tpu.dot_dimension_numbers<[1], [0], [0], [1], [0, 0, 1, 1], [], []>} : vector<8x64xf32>, vector<64x32xf32>, vector<8x32xf32> -> vector<8x32xf32>
    %c0_55 = arith.constant 0 : index
    %c0_56 = arith.constant 0 : index
    %c0_57 = arith.constant 0 : index
    %112 = vector.load %arg15[%c0_55, %c0_56, %c0_57] : memref<1x1x32xf32, #tpu.memory_space<vmem>>, vector<1x1x32xf32>
    %113 = vector.shape_cast %112 : vector<1x1x32xf32> to vector<1x32xf32>
    %114 = vector.broadcast %113 : vector<1x32xf32> to vector<8x32xf32>
    %115 = arith.addf %111, %114 : vector<8x32xf32>
    %116 = arith.addf %67, %115 : vector<8x32xf32>
    %c0_58 = arith.constant 0 : index
    %c0_59 = arith.constant 0 : index
    %117 = vector.load %arg19[%c0_58, %c0_59] : memref<8x32xf32, #tpu.memory_space<vmem>>, vector<8x32xf32>
    tpu.vector_store %arg19[%c0_58, %c0_59], %116 {strides = array<i32>} : memref<8x32xf32, #tpu.memory_space<vmem>>, vector<8x32xf32>,
    %c1_i32 = arith.constant 1 : i32
    %118 = arith.cmpi eq, %arg1, %c1_i32 : i32
    %119 = arith.extui %118 : i1 to i32
    %c0_i32_60 = arith.constant 0 : i32
    %120 = arith.cmpi ne, %119, %c0_i32_60 : i32
    scf.if %120 {
      %c0_61 = arith.constant 0 : index
      %c0_62 = arith.constant 0 : index
      %121 = vector.load %arg16[%c0_61, %c0_62] : memref<1x32xf32, #tpu.memory_space<vmem>>, vector<1x32xf32>
      %c0_63 = arith.constant 0 : index
      %c0_64 = arith.constant 0 : index
      %122 = vector.load %arg17[%c0_63, %c0_64] : memref<1x32xf32, #tpu.memory_space<vmem>>, vector<1x32xf32>
      %cst_65 = arith.constant dense<0.000000e+00> : vector<8xf32>
      %123 = vector.multi_reduction <add>, %116, %cst_65 [1] : vector<8x32xf32> to vector<8xf32>
      %124 = vector.shape_cast %123 : vector<8xf32> to vector<8x1xf32>
      %cst_66 = arith.constant 3.200000e+01 : f32
      %125 = vector.broadcast %cst_66 : f32 to vector<8x1xf32>
      %126 = arith.divf %124, %125 : vector<8x1xf32>
      %127 = vector.broadcast %126 : vector<8x1xf32> to vector<8x32xf32>
      %128 = arith.subf %116, %127 : vector<8x32xf32>
      %129 = arith.mulf %128, %128 : vector<8x32xf32>
      %cst_67 = arith.constant dense<0.000000e+00> : vector<8xf32>
      %130 = vector.multi_reduction <add>, %129, %cst_67 [1] : vector<8x32xf32> to vector<8xf32>
      %131 = vector.shape_cast %130 : vector<8xf32> to vector<8x1xf32>
      %cst_68 = arith.constant 3.200000e+01 : f32
      %132 = vector.broadcast %cst_68 : f32 to vector<8x1xf32>
      %133 = arith.divf %131, %132 : vector<8x1xf32>
      %134 = vector.broadcast %126 : vector<8x1xf32> to vector<8x32xf32>
      %135 = arith.subf %116, %134 : vector<8x32xf32>
      %cst_69 = arith.constant 9.99999997E-7 : f32
      %136 = vector.broadcast %cst_69 : f32 to vector<8x1xf32>
      %137 = arith.addf %133, %136 : vector<8x1xf32>
      %138 = math.rsqrt %137 : vector<8x1xf32>
      %139 = vector.broadcast %138 : vector<8x1xf32> to vector<8x32xf32>
      %140 = arith.mulf %135, %139 : vector<8x32xf32>
      %141 = vector.broadcast %121 : vector<1x32xf32> to vector<8x32xf32>
      %142 = arith.mulf %140, %141 : vector<8x32xf32>
      %143 = vector.broadcast %122 : vector<1x32xf32> to vector<8x32xf32>
      %144 = arith.addf %142, %143 : vector<8x32xf32>
      %c0_70 = arith.constant 0 : index
      %c0_71 = arith.constant 0 : index
      %c0_72 = arith.constant 0 : index
      %145 = vector.load %arg18[%c0_70, %c0_71, %c0_72] : memref<1x8x32xf32, #tpu.memory_space<vmem>>, vector<1x8x32xf32>
      %146 = vector.shape_cast %145 : vector<1x8x32xf32> to vector<8x32xf32>
      %147 = vector.shape_cast %144 : vector<8x32xf32> to vector<1x8x32xf32>
      tpu.vector_store %arg18[%c0_70, %c0_71, %c0_72], %147 {strides = array<i32>} : memref<1x8x32xf32, #tpu.memory_space<vmem>>, vector<1x8x32xf32>,
    } else {
    }
    return
  }
  func.func @transform_0(%arg0: i32, %arg1: i32) -> (i32, i32, i32) {
    %c0_i32 = arith.constant 0 : i32
    %c0_i32_0 = arith.constant 0 : i32
    %c0_i32_1 = arith.constant 0 : i32
    return %arg0, %c0_i32, %c0_i32_0 : i32, i32, i32
  }
  func.func @transform_1(%arg0: i32, %arg1: i32) -> (i32, i32) {
    %c0_i32 = arith.constant 0 : i32
    %c0_i32_0 = arith.constant 0 : i32
    %c0_i32_1 = arith.constant 0 : i32
    return %c0_i32, %c0_i32_0 : i32, i32
  }
  func.func @transform_2(%arg0: i32, %arg1: i32) -> (i32, i32, i32) {
    %c0_i32 = arith.constant 0 : i32
    %c0_i32_0 = arith.constant 0 : i32
    %c0_i32_1 = arith.constant 0 : i32
    return %arg1, %c0_i32, %c0_i32_0 : i32, i32, i32
  }
  func.func @transform_3(%arg0: i32, %arg1: i32) -> (i32, i32, i32) {
    %c0_i32 = arith.constant 0 : i32
    %c0_i32_0 = arith.constant 0 : i32
    %c0_i32_1 = arith.constant 0 : i32
    return %arg1, %c0_i32, %c0_i32_0 : i32, i32, i32
  }
  func.func @transform_4(%arg0: i32, %arg1: i32) -> (i32, i32, i32) {
    %c0_i32 = arith.constant 0 : i32
    %c0_i32_0 = arith.constant 0 : i32
    %c0_i32_1 = arith.constant 0 : i32
    return %arg1, %c0_i32, %c0_i32_0 : i32, i32, i32
  }
  func.func @transform_5(%arg0: i32, %arg1: i32) -> (i32, i32, i32) {
    %c0_i32 = arith.constant 0 : i32
    %c0_i32_0 = arith.constant 0 : i32
    %c0_i32_1 = arith.constant 0 : i32
    return %arg1, %c0_i32, %c0_i32_0 : i32, i32, i32
  }
  func.func @transform_6(%arg0: i32, %arg1: i32) -> (i32, i32, i32) {
    %c0_i32 = arith.constant 0 : i32
    %c0_i32_0 = arith.constant 0 : i32
    %c0_i32_1 = arith.constant 0 : i32
    return %arg1, %c0_i32, %c0_i32_0 : i32, i32, i32
  }
  func.func @transform_7(%arg0: i32, %arg1: i32) -> (i32, i32, i32) {
    %c0_i32 = arith.constant 0 : i32
    %c0_i32_0 = arith.constant 0 : i32
    %c0_i32_1 = arith.constant 0 : i32
    return %arg1, %c0_i32, %c0_i32_0 : i32, i32, i32
  }
  func.func @transform_8(%arg0: i32, %arg1: i32) -> (i32, i32, i32) {
    %c0_i32 = arith.constant 0 : i32
    %c0_i32_0 = arith.constant 0 : i32
    %c0_i32_1 = arith.constant 0 : i32
    return %arg1, %c0_i32, %c0_i32_0 : i32, i32, i32
  }
  func.func @transform_9(%arg0: i32, %arg1: i32) -> (i32, i32, i32) {
    %c0_i32 = arith.constant 0 : i32
    %c0_i32_0 = arith.constant 0 : i32
    %c0_i32_1 = arith.constant 0 : i32
    return %arg1, %c0_i32, %c0_i32_0 : i32, i32, i32
  }
  func.func @transform_10(%arg0: i32, %arg1: i32) -> (i32, i32, i32) {
    %c0_i32 = arith.constant 0 : i32
    %c0_i32_0 = arith.constant 0 : i32
    %c0_i32_1 = arith.constant 0 : i32
    return %arg1, %c0_i32, %c0_i32_0 : i32, i32, i32
  }
  func.func @transform_11(%arg0: i32, %arg1: i32) -> (i32, i32, i32) {
    %c0_i32 = arith.constant 0 : i32
    %c0_i32_0 = arith.constant 0 : i32
    %c0_i32_1 = arith.constant 0 : i32
    return %arg1, %c0_i32, %c0_i32_0 : i32, i32, i32
  }
  func.func @transform_12(%arg0: i32, %arg1: i32) -> (i32, i32, i32) {
    %c0_i32 = arith.constant 0 : i32
    %c0_i32_0 = arith.constant 0 : i32
    %c0_i32_1 = arith.constant 0 : i32
    return %arg1, %c0_i32, %c0_i32_0 : i32, i32, i32
  }
  func.func @transform_13(%arg0: i32, %arg1: i32) -> (i32, i32, i32) {
    %c0_i32 = arith.constant 0 : i32
    %c0_i32_0 = arith.constant 0 : i32
    %c0_i32_1 = arith.constant 0 : i32
    return %arg1, %c0_i32, %c0_i32_0 : i32, i32, i32
  }
  func.func @transform_14(%arg0: i32, %arg1: i32) -> (i32, i32) {
    %c0_i32 = arith.constant 0 : i32
    %c0_i32_0 = arith.constant 0 : i32
    %c0_i32_1 = arith.constant 0 : i32
    return %c0_i32, %c0_i32_0 : i32, i32
  }
  func.func @transform_15(%arg0: i32, %arg1: i32) -> (i32, i32) {
    %c0_i32 = arith.constant 0 : i32
    %c0_i32_0 = arith.constant 0 : i32
    %c0_i32_1 = arith.constant 0 : i32
    return %c0_i32, %c0_i32_0 : i32, i32
  }
  func.func @transform_16(%arg0: i32, %arg1: i32) -> (i32, i32, i32) {
    %c0_i32 = arith.constant 0 : i32
    %c0_i32_0 = arith.constant 0 : i32
    %c0_i32_1 = arith.constant 0 : i32
    return %arg0, %c0_i32, %c0_i32_0 : i32, i32, i32
  }
}

</mosaic_0001>

<llo_original>
// kernel: tpu_custom_call.1
$region0: #{tpu_custom_call.1}
  #allocation0 [shape = 'u32[]', space=smem, size = 0x4, offset = 0x4, fixed_abs, tag = 'smem constant byte address 0x4 - core index']
  #allocation1 [shape = 'u32[144,128]{1,0:T(1,128)}', space=vmem, size = 0x12000, scoped, tag = 'internal scratch']
  #allocation2 [shape = 'f32[8,32]{1,0:T(8,128)}', space=vmem, size = 0x1000, scoped, tag = 'scratch operand']
  %s0 = inlined_call_operand.hbm [shape: f32[2,8,32], index: 0, kind: input, shape index: {}]
  %s1 = inlined_call_operand.hbm [shape: f32[8,32], index: 1, kind: input, shape index: {}]
  %s2 = inlined_call_operand.vmem [shape: f32[2,1,32], index: 2, kind: input, shape index: {}]
  %s3 = inlined_call_operand.vmem [shape: f32[2,1,32], index: 3, kind: input, shape index: {}]
  %s4 = inlined_call_operand.vmem [shape: f32[2,32,96], index: 4, kind: input, shape index: {}]
  %s5 = inlined_call_operand.vmem [shape: f32[2,1,96], index: 5, kind: input, shape index: {}]
  %s6 = inlined_call_operand.vmem [shape: f32[2,32,32], index: 6, kind: input, shape index: {}]
  %s7 = inlined_call_operand.vmem [shape: f32[2,1,32], index: 7, kind: input, shape index: {}]
  %s8 = inlined_call_operand.vmem [shape: f32[2,1,32], index: 8, kind: input, shape index: {}]
  %s9 = inlined_call_operand.vmem [shape: f32[2,1,32], index: 9, kind: input, shape index: {}]
  %s10 = inlined_call_operand.vmem [shape: f32[2,32,64], index: 10, kind: input, shape index: {}]
  %s11 = inlined_call_operand.vmem [shape: f32[2,1,64], index: 11, kind: input, shape index: {}]
  %s12 = inlined_call_operand.vmem [shape: f32[2,64,32], index: 12, kind: input, shape index: {}]
  %s13 = inlined_call_operand.vmem [shape: f32[2,1,32], index: 13, kind: input, shape index: {}]
  %s14 = inlined_call_operand.vmem [shape: f32[1,32], index: 14, kind: input, shape index: {}]
  %s15 = inlined_call_operand.vmem [shape: f32[1,32], index: 15, kind: input, shape index: {}]
  %s16 = inlined_call_operand.hbm [shape: f32[2,8,32], index: 16, kind: output, shape index: {}]
  %s17 = sld [smem:[#allocation0]]
  $region113: #{tpu_custom_call.1} parent=0
    _
  %s19 = ssub.s32 1, %s17
  %s20 = scalar_select 0, %s19, %s17
  $region1: #{tpu_custom_call.1} parent=0
    #allocation3 [shape = 'u8[8192]{0}', space=vmem, size = 0x2000, scoped, tag = 'input window, operand 0']
    #allocation4 [shape = 's32[2]{0}', space=sflag, size = 0x8, scoped, tag = 'scoped memory for tpu_custom_call.1']
    #allocation5 [shape = 's32[2]{0}', space=sflag, size = 0x8, scoped, tag = 'scoped memory for tpu_custom_call.1']
    #allocation6 [shape = 'u8[4096]{0}', space=vmem, size = 0x1000, scoped, tag = 'input window, operand 1, single buffered']
    #allocation7 [shape = 's32[1]{0}', space=sflag, size = 0x4, scoped, tag = 'scoped memory for tpu_custom_call.1']
    #allocation8 [shape = 'u8[8192]{0}', space=vmem, size = 0x2000, scoped, tag = 'output window, operand 0']
    %21 = vsyncpa [#allocation4], 0
    %s22 = scalar_lea.sflag [#allocation4], 1
    %23 = vsyncpa %s22, 0
    %24 = vsyncpa [#allocation7], 0
    %25 = vsyncpa [#allocation5], 0
    %s26 = scalar_lea.sflag [#allocation5], 1
    %27 = vsyncpa %s26, 0
    loop: start=0, step=1, limit=6
    $region2: #{tpu_custom_call.1} parent=1 // loop_pre_header
      _
    $region3: #{tpu_custom_call.1} parent=1 // loop_header
      %s29 = sphi 0, %s33
      %p30 = scmp.ge.s32.totalorder %s29, 6
      %s36 = sphi 0, %s48
      %s37 = sphi 0, %s44
      %s38 = sphi 0, %s36
      %s39 = sphi 0, %s37
      %s40 = sphi 0, %s38
      %s41 = sphi 0, %s39
      %s51 = sphi 0, %s53
      %s54 = sphi 0, %s51
      %s55 = sphi 0, %s54
      %s71 = sphi 0, %s55
      %s75 = sphi 0, %s75
      %s77 = sphi 0, %s75
      %s78 = sphi 0, %s77
      %s92 = sphi 0, %s78
      %s98 = sphi 0, %s100
      %s101 = sphi 0, %s98
      %s102 = sphi 0, %s101
      %s118 = sphi 0, %s102
      %s124 = sphi 0, %s126
      %s127 = sphi 0, %s124
      %s128 = sphi 0, %s127
      %s144 = sphi 0, %s128
      %s150 = sphi 0, %s152
      %s153 = sphi 0, %s150
      %s154 = sphi 0, %s153
      %s170 = sphi 0, %s154
      %s176 = sphi 0, %s178
      %s179 = sphi 0, %s176
      %s180 = sphi 0, %s179
      %s196 = sphi 0, %s180
      %s202 = sphi 0, %s204
      %s205 = sphi 0, %s202
      %s206 = sphi 0, %s205
      %s222 = sphi 0, %s206
      %s228 = sphi 0, %s230
      %s231 = sphi 0, %s228
      %s232 = sphi 0, %s231
      %s248 = sphi 0, %s232
      %s254 = sphi 0, %s256
      %s257 = sphi 0, %s254
      %s258 = sphi 0, %s257
      %s274 = sphi 0, %s258
      %s280 = sphi 0, %s282
      %s283 = sphi 0, %s280
      %s284 = sphi 0, %s283
      %s300 = sphi 0, %s284
      %s306 = sphi 0, %s308
      %s309 = sphi 0, %s306
      %s310 = sphi 0, %s309
      %s326 = sphi 0, %s310
      %s332 = sphi 0, %s334
      %s335 = sphi 0, %s332
      %s336 = sphi 0, %s335
      %s352 = sphi 0, %s336
      %s358 = sphi 0, %s360
      %s361 = sphi 0, %s358
      %s362 = sphi 0, %s361
      %s378 = sphi 0, %s362
      %s384 = sphi 0, %s386
      %s387 = sphi 0, %s384
      %s388 = sphi 0, %s387
      %s404 = sphi 0, %s388
      %s408 = sphi 0, %s408
      %s410 = sphi 0, %s408
      %s411 = sphi 0, %s410
      %s425 = sphi 0, %s411
      %s429 = sphi 0, %s429
      %s431 = sphi 0, %s429
      %s432 = sphi 0, %s431
      %s446 = sphi 0, %s432
      %s452 = sphi 0, %s454
      %s455 = sphi 0, %s452
      %s456 = sphi 0, %s455
      %s472 = sphi 0, %s456
    $region4: #{tpu_custom_call.1} parent=1 // loop_header_branch
      %32 = sbr.rel (%p30) target = $region8
    $region5: #{tpu_custom_call.1} parent=1 // loop_body
      %s34 = ssub.s32 %s29, 1
      %s35 = ssub.s32 %s29, 2
      %s42 = sadd.s32 1, %s37
      %p43 = scmp.ge.s32.totalorder %s42, 2
      %s44 = scalar_select %p43, 0, %s42
      %s45 = sadd.s32 1, %s36
      %s46 = scalar_select %p43, %s45, %s36
      %p47 = scmp.ge.s32.totalorder %s46, 2
      %s48 = scalar_select %p47, 0, %s46
      %s49 = ssub.s32 %s36, %s48
      %p50 = scmp.eq.s32.totalorder %s49, 0
      %s52 = sadd.s32 %s51, 1
      %s53 = scalar_select %p50, %s51, %s52
      %p56 = pneg %p50
      %p57 = scmp.eq.s32.totalorder %s29, 3
      %p58 = por %p56, %p57
      %p59 = scmp.ne.s32.totalorder %s51, %s54
      %p60 = scmp.eq.s32.totalorder %s29, 0
      %p61 = por %p59, %p60
      %p62 = scmp.ne.s32.totalorder %s51, %s54
      %p63 = scmp.eq.s32.totalorder %s34, 3
      %p64 = por %p62, %p63
      %p65 = scmp.ne.s32.totalorder %s54, %s55
      %p66 = scmp.eq.s32.totalorder %s34, 0
      %p67 = por %p65, %p66
      %p68 = scmp.ne.s32.totalorder %s54, %s55
      %p69 = scmp.eq.s32.totalorder %s35, 3
      %p70 = por %p68, %p69
      %p72 = scmp.ne.s32.totalorder %s55, %s71
      %p73 = scmp.eq.s32.totalorder %s35, 0
      %p74 = por %p72, %p73
      %s76 = sadd.s32 %s75, 1
      %p79 = scmp.eq.s32.totalorder %s29, 3
      %p80 = scmp.ne.s32.totalorder %s75, %s77
      %p81 = scmp.eq.s32.totalorder %s29, 0
      %p82 = por %p80, %p81
      %p83 = scmp.ne.s32.totalorder %s75, %s77
      %p84 = scmp.eq.s32.totalorder %s34, 3
      %p85 = por %p83, %p84
      %p86 = scmp.ne.s32.totalorder %s77, %s78
      %p87 = scmp.eq.s32.totalorder %s34, 0
      %p88 = por %p86, %p87
      %p89 = scmp.ne.s32.totalorder %s77, %s78
      %p90 = scmp.eq.s32.totalorder %s35, 3
      %p91 = por %p89, %p90
      %p93 = scmp.ne.s32.totalorder %s78, %s92
      %p94 = scmp.eq.s32.totalorder %s35, 0
      %p95 = por %p93, %p94
      %s96 = ssub.s32 %s37, %s44
      %p97 = scmp.eq.s32.totalorder %s96, 0
      %s99 = sadd.s32 %s98, 1
      %s100 = scalar_select %p97, %s98, %s99
      %p103 = pneg %p97
      %p104 = scmp.eq.s32.totalorder %s29, 3
      %p105 = por %p103, %p104
      %p106 = scmp.ne.s32.totalorder %s98, %s101
      %p107 = scmp.eq.s32.totalorder %s29, 0
      %p108 = por %p106, %p107
      %p109 = scmp.ne.s32.totalorder %s98, %s101
      %p110 = scmp.eq.s32.totalorder %s34, 3
      %p111 = por %p109, %p110
      %p112 = scmp.ne.s32.totalorder %s101, %s102
      %p113 = scmp.eq.s32.totalorder %s34, 0
      %p114 = por %p112, %p113
      %p115 = scmp.ne.s32.totalorder %s101, %s102
      %p116 = scmp.eq.s32.totalorder %s35, 3
      %p117 = por %p115, %p116
      %p119 = scmp.ne.s32.totalorder %s102, %s118
      %p120 = scmp.eq.s32.totalorder %s35, 0
      %p121 = por %p119, %p120
      %s122 = ssub.s32 %s37, %s44
      %p123 = scmp.eq.s32.totalorder %s122, 0
      %s125 = sadd.s32 %s124, 1
      %s126 = scalar_select %p123, %s124, %s125
      %p129 = pneg %p123
      %p130 = scmp.eq.s32.totalorder %s29, 3
      %p131 = por %p129, %p130
      %p132 = scmp.ne.s32.totalorder %s124, %s127
      %p133 = scmp.eq.s32.totalorder %s29, 0
      %p134 = por %p132, %p133
      %p135 = scmp.ne.s32.totalorder %s124, %s127
      %p136 = scmp.eq.s32.totalorder %s34, 3
      %p137 = por %p135, %p136
      %p138 = scmp.ne.s32.totalorder %s127, %s128
      %p139 = scmp.eq.s32.totalorder %s34, 0
      %p140 = por %p138, %p139
      %p141 = scmp.ne.s32.totalorder %s127, %s128
      %p142 = scmp.eq.s32.totalorder %s35, 3
      %p143 = por %p141, %p142
      %p145 = scmp.ne.s32.totalorder %s128, %s144
      %p146 = scmp.eq.s32.totalorder %s35, 0
      %p147 = por %p145, %p146
      %s148 = ssub.s32 %s37, %s44
      %p149 = scmp.eq.s32.totalorder %s148, 0
      %s151 = sadd.s32 %s150, 1
      %s152 = scalar_select %p149, %s150, %s151
      %p155 = pneg %p149
      %p156 = scmp.eq.s32.totalorder %s29, 3
      %p157 = por %p155, %p156
      %p158 = scmp.ne.s32.totalorder %s150, %s153
      %p159 = scmp.eq.s32.totalorder %s29, 0
      %p160 = por %p158, %p159
      %p161 = scmp.ne.s32.totalorder %s150, %s153
      %p162 = scmp.eq.s32.totalorder %s34, 3
      %p163 = por %p161, %p162
      %p164 = scmp.ne.s32.totalorder %s153, %s154
      %p165 = scmp.eq.s32.totalorder %s34, 0
      %p166 = por %p164, %p165
      %p167 = scmp.ne.s32.totalorder %s153, %s154
      %p168 = scmp.eq.s32.totalorder %s35, 3
      %p169 = por %p167, %p168
      %p171 = scmp.ne.s32.totalorder %s154, %s170
      %p172 = scmp.eq.s32.totalorder %s35, 0
      %p173 = por %p171, %p172
      %s174 = ssub.s32 %s37, %s44
      %p175 = scmp.eq.s32.totalorder %s174, 0
      %s177 = sadd.s32 %s176, 1
      %s178 = scalar_select %p175, %s176, %s177
      %p181 = pneg %p175
      %p182 = scmp.eq.s32.totalorder %s29, 3
      %p183 = por %p181, %p182
      %p184 = scmp.ne.s32.totalorder %s176, %s179
      %p185 = scmp.eq.s32.totalorder %s29, 0
      %p186 = por %p184, %p185
      %p187 = scmp.ne.s32.totalorder %s176, %s179
      %p188 = scmp.eq.s32.totalorder %s34, 3
      %p189 = por %p187, %p188
      %p190 = scmp.ne.s32.totalorder %s179, %s180
      %p191 = scmp.eq.s32.totalorder %s34, 0
      %p192 = por %p190, %p191
      %p193 = scmp.ne.s32.totalorder %s179, %s180
      %p194 = scmp.eq.s32.totalorder %s35, 3
      %p195 = por %p193, %p194
      %p197 = scmp.ne.s32.totalorder %s180, %s196
      %p198 = scmp.eq.s32.totalorder %s35, 0
      %p199 = por %p197, %p198
      %s200 = ssub.s32 %s37, %s44
      %p201 = scmp.eq.s32.totalorder %s200, 0
      %s203 = sadd.s32 %s202, 1
      %s204 = scalar_select %p201, %s202, %s203
      %p207 = pneg %p201
      %p208 = scmp.eq.s32.totalorder %s29, 3
      %p209 = por %p207, %p208
      %p210 = scmp.ne.s32.totalorder %s202, %s205
      %p211 = scmp.eq.s32.totalorder %s29, 0
      %p212 = por %p210, %p211
      %p213 = scmp.ne.s32.totalorder %s202, %s205
      %p214 = scmp.eq.s32.totalorder %s34, 3
      %p215 = por %p213, %p214
      %p216 = scmp.ne.s32.totalorder %s205, %s206
      %p217 = scmp.eq.s32.totalorder %s34, 0
      %p218 = por %p216, %p217
      %p219 = scmp.ne.s32.totalorder %s205, %s206
      %p220 = scmp.eq.s32.totalorder %s35, 3
      %p221 = por %p219, %p220
      %p223 = scmp.ne.s32.totalorder %s206, %s222
      %p224 = scmp.eq.s32.totalorder %s35, 0
      %p225 = por %p223, %p224
      %s226 = ssub.s32 %s37, %s44
      %p227 = scmp.eq.s32.totalorder %s226, 0
      %s229 = sadd.s32 %s228, 1
      %s230 = scalar_select %p227, %s228, %s229
      %p233 = pneg %p227
      %p234 = scmp.eq.s32.totalorder %s29, 3
      %p235 = por %p233, %p234
      %p236 = scmp.ne.s32.totalorder %s228, %s231
      %p237 = scmp.eq.s32.totalorder %s29, 0
      %p238 = por %p236, %p237
      %p239 = scmp.ne.s32.totalorder %s228, %s231
      %p240 = scmp.eq.s32.totalorder %s34, 3
      %p241 = por %p239, %p240
      %p242 = scmp.ne.s32.totalorder %s231, %s232
      %p243 = scmp.eq.s32.totalorder %s34, 0
      %p244 = por %p242, %p243
      %p245 = scmp.ne.s32.totalorder %s231, %s232
      %p246 = scmp.eq.s32.totalorder %s35, 3
      %p247 = por %p245, %p246
      %p249 = scmp.ne.s32.totalorder %s232, %s248
      %p250 = scmp.eq.s32.totalorder %s35, 0
      %p251 = por %p249, %p250
      %s252 = ssub.s32 %s37, %s44
      %p253 = scmp.eq.s32.totalorder %s252, 0
      %s255 = sadd.s32 %s254, 1
      %s256 = scalar_select %p253, %s254, %s255
      %p259 = pneg %p253
      %p260 = scmp.eq.s32.totalorder %s29, 3
      %p261 = por %p259, %p260
      %p262 = scmp.ne.s32.totalorder %s254, %s257
      %p263 = scmp.eq.s32.totalorder %s29, 0
      %p264 = por %p262, %p263
      %p265 = scmp.ne.s32.totalorder %s254, %s257
      %p266 = scmp.eq.s32.totalorder %s34, 3
      %p267 = por %p265, %p266
      %p268 = scmp.ne.s32.totalorder %s257, %s258
      %p269 = scmp.eq.s32.totalorder %s34, 0
      %p270 = por %p268, %p269
      %p271 = scmp.ne.s32.totalorder %s257, %s258
      %p272 = scmp.eq.s32.totalorder %s35, 3
      %p273 = por %p271, %p272
      %p275 = scmp.ne.s32.totalorder %s258, %s274
      %p276 = scmp.eq.s32.totalorder %s35, 0
      %p277 = por %p275, %p276
      %s278 = ssub.s32 %s37, %s44
      %p279 = scmp.eq.s32.totalorder %s278, 0
      %s281 = sadd.s32 %s280, 1
      %s282 = scalar_select %p279, %s280, %s281
      %p285 = pneg %p279
      %p286 = scmp.eq.s32.totalorder %s29, 3
      %p287 = por %p285, %p286
      %p288 = scmp.ne.s32.totalorder %s280, %s283
      %p289 = scmp.eq.s32.totalorder %s29, 0
      %p290 = por %p288, %p289
      %p291 = scmp.ne.s32.totalorder %s280, %s283
      %p292 = scmp.eq.s32.totalorder %s34, 3
      %p293 = por %p291, %p292
      %p294 = scmp.ne.s32.totalorder %s283, %s284
      %p295 = scmp.eq.s32.totalorder %s34, 0
      %p296 = por %p294, %p295
      %p297 = scmp.ne.s32.totalorder %s283, %s284
      %p298 = scmp.eq.s32.totalorder %s35, 3
      %p299 = por %p297, %p298
      %p301 = scmp.ne.s32.totalorder %s284, %s300
      %p302 = scmp.eq.s32.totalorder %s35, 0
      %p303 = por %p301, %p302
      %s304 = ssub.s32 %s37, %s44
      %p305 = scmp.eq.s32.totalorder %s304, 0
      %s307 = sadd.s32 %s306, 1
      %s308 = scalar_select %p305, %s306, %s307
      %p311 = pneg %p305
      %p312 = scmp.eq.s32.totalorder %s29, 3
      %p313 = por %p311, %p312
      %p314 = scmp.ne.s32.totalorder %s306, %s309
      %p315 = scmp.eq.s32.totalorder %s29, 0
      %p316 = por %p314, %p315
      %p317 = scmp.ne.s32.totalorder %s306, %s309
      %p318 = scmp.eq.s32.totalorder %s34, 3
      %p319 = por %p317, %p318
      %p320 = scmp.ne.s32.totalorder %s309, %s310
      %p321 = scmp.eq.s32.totalorder %s34, 0
      %p322 = por %p320, %p321
      %p323 = scmp.ne.s32.totalorder %s309, %s310
      %p324 = scmp.eq.s32.totalorder %s35, 3
      %p325 = por %p323, %p324
      %p327 = scmp.ne.s32.totalorder %s310, %s326
      %p328 = scmp.eq.s32.totalorder %s35, 0
      %p329 = por %p327, %p328
      %s330 = ssub.s32 %s37, %s44
      %p331 = scmp.eq.s32.totalorder %s330, 0
      %s333 = sadd.s32 %s332, 1
      %s334 = scalar_select %p331, %s332, %s333
      %p337 = pneg %p331
      %p338 = scmp.eq.s32.totalorder %s29, 3
      %p339 = por %p337, %p338
      %p340 = scmp.ne.s32.totalorder %s332, %s335
      %p341 = scmp.eq.s32.totalorder %s29, 0
      %p342 = por %p340, %p341
      %p343 = scmp.ne.s32.totalorder %s332, %s335
      %p344 = scmp.eq.s32.totalorder %s34, 3
      %p345 = por %p343, %p344
      %p346 = scmp.ne.s32.totalorder %s335, %s336
      %p347 = scmp.eq.s32.totalorder %s34, 0
      %p348 = por %p346, %p347
      %p349 = scmp.ne.s32.totalorder %s335, %s336
      %p350 = scmp.eq.s32.totalorder %s35, 3
      %p351 = por %p349, %p350
      %p353 = scmp.ne.s32.totalorder %s336, %s352
      %p354 = scmp.eq.s32.totalorder %s35, 0
      %p355 = por %p353, %p354
      %s356 = ssub.s32 %s37, %s44
      %p357 = scmp.eq.s32.totalorder %s356, 0
      %s359 = sadd.s32 %s358, 1
      %s360 = scalar_select %p357, %s358, %s359
      %p363 = pneg %p357
      %p364 = scmp.eq.s32.totalorder %s29, 3
      %p365 = por %p363, %p364
      %p366 = scmp.ne.s32.totalorder %s358, %s361
      %p367 = scmp.eq.s32.totalorder %s29, 0
      %p368 = por %p366, %p367
      %p369 = scmp.ne.s32.totalorder %s358, %s361
      %p370 = scmp.eq.s32.totalorder %s34, 3
      %p371 = por %p369, %p370
      %p372 = scmp.ne.s32.totalorder %s361, %s362
      %p373 = scmp.eq.s32.totalorder %s34, 0
      %p374 = por %p372, %p373
      %p375 = scmp.ne.s32.totalorder %s361, %s362
      %p376 = scmp.eq.s32.totalorder %s35, 3
      %p377 = por %p375, %p376
      %p379 = scmp.ne.s32.totalorder %s362, %s378
      %p380 = scmp.eq.s32.totalorder %s35, 0
      %p381 = por %p379, %p380
      %s382 = ssub.s32 %s37, %s44
      %p383 = scmp.eq.s32.totalorder %s382, 0
      %s385 = sadd.s32 %s384, 1
      %s386 = scalar_select %p383, %s384, %s385
      %p389 = pneg %p383
      %p390 = scmp.eq.s32.totalorder %s29, 3
      %p391 = por %p389, %p390
      %p392 = scmp.ne.s32.totalorder %s384, %s387
      %p393 = scmp.eq.s32.totalorder %s29, 0
      %p394 = por %p392, %p393
      %p395 = scmp.ne.s32.totalorder %s384, %s387
      %p396 = scmp.eq.s32.totalorder %s34, 3
      %p397 = por %p395, %p396
      %p398 = scmp.ne.s32.totalorder %s387, %s388
      %p399 = scmp.eq.s32.totalorder %s34, 0
      %p400 = por %p398, %p399
      %p401 = scmp.ne.s32.totalorder %s387, %s388
      %p402 = scmp.eq.s32.totalorder %s35, 3
      %p403 = por %p401, %p402
      %p405 = scmp.ne.s32.totalorder %s388, %s404
      %p406 = scmp.eq.s32.totalorder %s35, 0
      %p407 = por %p405, %p406
      %s409 = sadd.s32 %s408, 1
      %p412 = scmp.eq.s32.totalorder %s29, 3
      %p413 = scmp.ne.s32.totalorder %s408, %s410
      %p414 = scmp.eq.s32.totalorder %s29, 0
      %p415 = por %p413, %p414
      %p416 = scmp.ne.s32.totalorder %s408, %s410
      %p417 = scmp.eq.s32.totalorder %s34, 3
      %p418 = por %p416, %p417
      %p419 = scmp.ne.s32.totalorder %s410, %s411
      %p420 = scmp.eq.s32.totalorder %s34, 0
      %p421 = por %p419, %p420
      %p422 = scmp.ne.s32.totalorder %s410, %s411
      %p423 = scmp.eq.s32.totalorder %s35, 3
      %p424 = por %p422, %p423
      %p426 = scmp.ne.s32.totalorder %s411, %s425
      %p427 = scmp.eq.s32.totalorder %s35, 0
      %p428 = por %p426, %p427
      %s430 = sadd.s32 %s429, 1
      %p433 = scmp.eq.s32.totalorder %s29, 3
      %p434 = scmp.ne.s32.totalorder %s429, %s431
      %p435 = scmp.eq.s32.totalorder %s29, 0
      %p436 = por %p434, %p435
      %p437 = scmp.ne.s32.totalorder %s429, %s431
      %p438 = scmp.eq.s32.totalorder %s34, 3
      %p439 = por %p437, %p438
      %p440 = scmp.ne.s32.totalorder %s431, %s432
      %p441 = scmp.eq.s32.totalorder %s34, 0
      %p442 = por %p440, %p441
      %p443 = scmp.ne.s32.totalorder %s431, %s432
      %p444 = scmp.eq.s32.totalorder %s35, 3
      %p445 = por %p443, %p444
      %p447 = scmp.ne.s32.totalorder %s432, %s446
      %p448 = scmp.eq.s32.totalorder %s35, 0
      %p449 = por %p447, %p448
      %s450 = ssub.s32 %s36, %s48
      %p451 = scmp.eq.s32.totalorder %s450, 0
      %s453 = sadd.s32 %s452, 1
      %s454 = scalar_select %p451, %s452, %s453
      %p457 = pneg %p451
      %p458 = scmp.eq.s32.totalorder %s29, 3
      %p459 = por %p457, %p458
      %p460 = scmp.ne.s32.totalorder %s452, %s455
      %p461 = scmp.eq.s32.totalorder %s29, 0
      %p462 = por %p460, %p461
      %p463 = scmp.ne.s32.totalorder %s452, %s455
      %p464 = scmp.eq.s32.totalorder %s34, 3
      %p465 = por %p463, %p464
      %p466 = scmp.ne.s32.totalorder %s455, %s456
      %p467 = scmp.eq.s32.totalorder %s34, 0
      %p468 = por %p466, %p467
      %p469 = scmp.ne.s32.totalorder %s455, %s456
      %p470 = scmp.eq.s32.totalorder %s35, 3
      %p471 = por %p469, %p470
      %p473 = scmp.ne.s32.totalorder %s456, %s472
      %p474 = scmp.eq.s32.totalorder %s35, 0
      %p475 = por %p473, %p474
      %p476 = scmp.le.s32.totalorder 1, %s29
      %p477 = scmp.lt.s32.totalorder %s29, 5
      %p478 = pnand %p476, %p477
      %p479 = pneg %p478
      // Predicated region
      $region9: #{tpu_custom_call.1} parent=5 // pred_check
        _
      $region10: #{tpu_custom_call.1} parent=5 // pred_check_branch
        %481 = sbr.rel (%p478) target = $region12
      $region11: #{tpu_custom_call.1} parent=5 // pred_region
        %s482 = ssub.s32 %s29, 1
        // Predicated region
        $region13: #{tpu_custom_call.1} parent=11 // pred_check
          %p483 = pneg %p88
        $region14: #{tpu_custom_call.1} parent=11 // pred_check_branch
          %485 = sbr.rel (%p483) target = $region16
        $region15: #{tpu_custom_call.1} parent=11 // pred_region
          %s487 = ssub.s32 128, 128
          %488 = vsyncadd [#allocation7], %s487
          %s490 = sshll.u32 [#allocation6], 4
          %s491 = int_to_ptr.vmem [resolvable:$true] %s490
          %493 = dma.hbm_to_vmem [thread:$0]  %s1, 128, %s491, [#allocation7]
        $region16: #{tpu_custom_call.1} parent=11 // pred_fallthru
          _
        // Predicated region
        $region17: #{tpu_custom_call.1} parent=11 // pred_check
          %p494 = pneg %p421
        $region18: #{tpu_custom_call.1} parent=11 // pred_check_branch
          %496 = sbr.rel (%p494) target = $region20
        $region19: #{tpu_custom_call.1} parent=11 // pred_region
          _
        $region20: #{tpu_custom_call.1} parent=11 // pred_fallthru
          _
        // Predicated region
        $region21: #{tpu_custom_call.1} parent=11 // pred_check
          %p497 = pneg %p442
        $region22: #{tpu_custom_call.1} parent=11 // pred_check_branch
          %499 = sbr.rel (%p497) target = $region24
        $region23: #{tpu_custom_call.1} parent=11 // pred_region
          _
        $region24: #{tpu_custom_call.1} parent=11 // pred_fallthru
          _
      $region12: #{tpu_custom_call.1} parent=5 // pred_fallthru
        _
      %p500 = scmp.lt.s32.totalorder %s29, 4
      // Predicated region
      $region25: #{tpu_custom_call.1} parent=5 // pred_check
        %p501 = pneg %p500
      $region26: #{tpu_custom_call.1} parent=5 // pred_check_branch
        %503 = sbr.rel (%p501) target = $region28
      $region27: #{tpu_custom_call.1} parent=5 // pred_region
        // Predicated region
        $region29: #{tpu_custom_call.1} parent=27 // pred_check
          %p504 = pneg %p61
        $region30: #{tpu_custom_call.1} parent=27 // pred_check_branch
          %506 = sbr.rel (%p504) target = $region32
        $region31: #{tpu_custom_call.1} parent=27 // pred_region
          %s507 = sand.u32 %s51, 1
          %s508 = scalar_lea.sflag [#allocation4], %s507
          %s509 = sand.u32 %s51, 1
          %s510 = smul.addr %s509, 8
          %s511 = scalar_lea.vmem [#allocation3], %s510
          %s513 = ssub.s32 128, 128
          %514 = vsyncadd %s508, %s513
          %s515 = smul.addr %s36, 128
          %s516 = scalar_lea.hbm %s0, %s515
          %s518 = sshll.u32 %s511, 4
          %s519 = int_to_ptr.vmem [resolvable:$true] %s518
          %521 = dma.hbm_to_vmem [thread:$0]  %s516, 128, %s519, %s508
        $region32: #{tpu_custom_call.1} parent=27 // pred_fallthru
          _
        // Predicated region
        $region33: #{tpu_custom_call.1} parent=27 // pred_check
          %p522 = pneg %p108
        $region34: #{tpu_custom_call.1} parent=27 // pred_check_branch
          %524 = sbr.rel (%p522) target = $region36
        $region35: #{tpu_custom_call.1} parent=27 // pred_region
          %p525 = scmp.lt.s32.totalorder %s37, 1
          %s526 = scalar_select %p525, %s37, 1
          %s527 = scalar_lea.vmem %s2, %s526
        $region36: #{tpu_custom_call.1} parent=27 // pred_fallthru
          _
        // Predicated region
        $region37: #{tpu_custom_call.1} parent=27 // pred_check
          %p528 = pneg %p134
        $region38: #{tpu_custom_call.1} parent=27 // pred_check_branch
          %530 = sbr.rel (%p528) target = $region40
        $region39: #{tpu_custom_call.1} parent=27 // pred_region
          %p531 = scmp.lt.s32.totalorder %s37, 1
          %s532 = scalar_select %p531, %s37, 1
          %s533 = scalar_lea.vmem %s3, %s532
        $region40: #{tpu_custom_call.1} parent=27 // pred_fallthru
          _
        // Predicated region
        $region41: #{tpu_custom_call.1} parent=27 // pred_check
          %p534 = pneg %p160
        $region42: #{tpu_custom_call.1} parent=27 // pred_check_branch
          %536 = sbr.rel (%p534) target = $region44
        $region43: #{tpu_custom_call.1} parent=27 // pred_region
          %p537 = scmp.lt.s32.totalorder %s37, 1
          %s538 = scalar_select %p537, %s37, 1
          %s539 = smul.addr %s538, 4
          %s540 = smul.addr %s539, 8
          %s541 = scalar_lea.vmem %s4, %s540
        $region44: #{tpu_custom_call.1} parent=27 // pred_fallthru
          _
        // Predicated region
        $region45: #{tpu_custom_call.1} parent=27 // pred_check
          %p542 = pneg %p186
        $region46: #{tpu_custom_call.1} parent=27 // pred_check_branch
          %544 = sbr.rel (%p542) target = $region48
        $region47: #{tpu_custom_call.1} parent=27 // pred_region
          %p545 = scmp.lt.s32.totalorder %s37, 1
          %s546 = scalar_select %p545, %s37, 1
          %s547 = scalar_lea.vmem %s5, %s546
        $region48: #{tpu_custom_call.1} parent=27 // pred_fallthru
          _
        // Predicated region
        $region49: #{tpu_custom_call.1} parent=27 // pred_check
          %p548 = pneg %p212
        $region50: #{tpu_custom_call.1} parent=27 // pred_check_branch
          %550 = sbr.rel (%p548) target = $region52
        $region51: #{tpu_custom_call.1} parent=27 // pred_region
          %p551 = scmp.lt.s32.totalorder %s37, 1
          %s552 = scalar_select %p551, %s37, 1
          %s553 = smul.addr %s552, 4
          %s554 = smul.addr %s553, 8
          %s555 = scalar_lea.vmem %s6, %s554
        $region52: #{tpu_custom_call.1} parent=27 // pred_fallthru
          _
        // Predicated region
        $region53: #{tpu_custom_call.1} parent=27 // pred_check
          %p556 = pneg %p238
        $region54: #{tpu_custom_call.1} parent=27 // pred_check_branch
          %558 = sbr.rel (%p556) target = $region56
        $region55: #{tpu_custom_call.1} parent=27 // pred_region
          %p559 = scmp.lt.s32.totalorder %s37, 1
          %s560 = scalar_select %p559, %s37, 1
          %s561 = scalar_lea.vmem %s7, %s560
        $region56: #{tpu_custom_call.1} parent=27 // pred_fallthru
          _
        // Predicated region
        $region57: #{tpu_custom_call.1} parent=27 // pred_check
          %p562 = pneg %p264
        $region58: #{tpu_custom_call.1} parent=27 // pred_check_branch
          %564 = sbr.rel (%p562) target = $region60
        $region59: #{tpu_custom_call.1} parent=27 // pred_region
          %p565 = scmp.lt.s32.totalorder %s37, 1
          %s566 = scalar_select %p565, %s37, 1
          %s567 = scalar_lea.vmem %s8, %s566
        $region60: #{tpu_custom_call.1} parent=27 // pred_fallthru
          _
        // Predicated region
        $region61: #{tpu_custom_call.1} parent=27 // pred_check
          %p568 = pneg %p290
        $region62: #{tpu_custom_call.1} parent=27 // pred_check_branch
          %570 = sbr.rel (%p568) target = $region64
        $region63: #{tpu_custom_call.1} parent=27 // pred_region
          %p571 = scmp.lt.s32.totalorder %s37, 1
          %s572 = scalar_select %p571, %s37, 1
          %s573 = scalar_lea.vmem %s9, %s572
        $region64: #{tpu_custom_call.1} parent=27 // pred_fallthru
          _
        // Predicated region
        $region65: #{tpu_custom_call.1} parent=27 // pred_check
          %p574 = pneg %p316
        $region66: #{tpu_custom_call.1} parent=27 // pred_check_branch
          %576 = sbr.rel (%p574) target = $region68
        $region67: #{tpu_custom_call.1} parent=27 // pred_region
          %p577 = scmp.lt.s32.totalorder %s37, 1
          %s578 = scalar_select %p577, %s37, 1
          %s579 = smul.addr %s578, 4
          %s580 = smul.addr %s579, 8
          %s581 = scalar_lea.vmem %s10, %s580
        $region68: #{tpu_custom_call.1} parent=27 // pred_fallthru
          _
        // Predicated region
        $region69: #{tpu_custom_call.1} parent=27 // pred_check
          %p582 = pneg %p342
        $region70: #{tpu_custom_call.1} parent=27 // pred_check_branch
          %584 = sbr.rel (%p582) target = $region72
        $region71: #{tpu_custom_call.1} parent=27 // pred_region
          %p585 = scmp.lt.s32.totalorder %s37, 1
          %s586 = scalar_select %p585, %s37, 1
          %s587 = scalar_lea.vmem %s11, %s586
        $region72: #{tpu_custom_call.1} parent=27 // pred_fallthru
          _
        // Predicated region
        $region73: #{tpu_custom_call.1} parent=27 // pred_check
          %p588 = pneg %p368
        $region74: #{tpu_custom_call.1} parent=27 // pred_check_branch
          %590 = sbr.rel (%p588) target = $region76
        $region75: #{tpu_custom_call.1} parent=27 // pred_region
          %p591 = scmp.lt.s32.totalorder %s37, 1
          %s592 = scalar_select %p591, %s37, 1
          %s593 = smul.addr %s592, 8
          %s594 = smul.addr %s593, 8
          %s595 = scalar_lea.vmem %s12, %s594
        $region76: #{tpu_custom_call.1} parent=27 // pred_fallthru
          _
        // Predicated region
        $region77: #{tpu_custom_call.1} parent=27 // pred_check
          %p596 = pneg %p394
        $region78: #{tpu_custom_call.1} parent=27 // pred_check_branch
          %598 = sbr.rel (%p596) target = $region80
        $region79: #{tpu_custom_call.1} parent=27 // pred_region
          %p599 = scmp.lt.s32.totalorder %s37, 1
          %s600 = scalar_select %p599, %s37, 1
          %s601 = scalar_lea.vmem %s13, %s600
        $region80: #{tpu_custom_call.1} parent=27 // pred_fallthru
          _
      $region28: #{tpu_custom_call.1} parent=5 // pred_fallthru
        _
      %p602 = scmp.le.s32.totalorder 1, %s29
      %p603 = scmp.lt.s32.totalorder %s29, 5
      %p604 = pnand %p602, %p603
      %p605 = pneg %p604
      // Predicated region
      $region81: #{tpu_custom_call.1} parent=5 // pred_check
        _
      $region82: #{tpu_custom_call.1} parent=5 // pred_check_branch
        %607 = sbr.rel (%p604) target = $region84
      $region83: #{tpu_custom_call.1} parent=5 // pred_region
        %s608 = ssub.s32 %s29, 1
        %s609 = sand.u32 %s54, 1
        %s610 = scalar_lea.sflag [#allocation4], %s609
        %s611 = sand.u32 %s54, 1
        %s612 = smul.addr %s611, 8
        %s613 = scalar_lea.vmem [#allocation3], %s612
        // Predicated region
        $region85: #{tpu_custom_call.1} parent=83 // pred_check
          %p614 = pneg %p67
        $region86: #{tpu_custom_call.1} parent=83 // pred_check_branch
          %616 = sbr.rel (%p614) target = $region88
        $region87: #{tpu_custom_call.1} parent=83 // pred_region
          %617 = dma.done %s610, 128
        $region88: #{tpu_custom_call.1} parent=83 // pred_fallthru
          _
        // Predicated region
        $region89: #{tpu_custom_call.1} parent=83 // pred_check
          %p618 = pneg %p88
        $region90: #{tpu_custom_call.1} parent=83 // pred_check_branch
          %620 = sbr.rel (%p618) target = $region92
        $region91: #{tpu_custom_call.1} parent=83 // pred_region
          %621 = dma.done [#allocation7], 128
        $region92: #{tpu_custom_call.1} parent=83 // pred_fallthru
          _
        %s622 = sand.u32 %s54, 1
        %s623 = scalar_lea.sflag [#allocation4], %s622
        %s624 = sand.u32 %s54, 1
        %s625 = smul.addr %s624, 8
        %s626 = scalar_lea.vmem [#allocation3], %s625
        %p627 = pneg %p67
        %p628 = pneg %p64
        %p629 = pneg %p88
        %p630 = pneg %p85
        %p631 = scmp.lt.s32.totalorder %s39, 1
        %s632 = scalar_select %p631, %s39, 1
        %s633 = scalar_lea.vmem %s2, %s632
        %p634 = pneg %p114
        %p635 = pneg %p111
        %p636 = scmp.lt.s32.totalorder %s39, 1
        %s637 = scalar_select %p636, %s39, 1
        %s638 = scalar_lea.vmem %s3, %s637
        %p639 = pneg %p140
        %p640 = pneg %p137
        %p641 = scmp.lt.s32.totalorder %s39, 1
        %s642 = scalar_select %p641, %s39, 1
        %s643 = smul.addr %s642, 4
        %s644 = smul.addr %s643, 8
        %s645 = scalar_lea.vmem %s4, %s644
        %p646 = pneg %p166
        %p647 = pneg %p163
        %p648 = scmp.lt.s32.totalorder %s39, 1
        %s649 = scalar_select %p648, %s39, 1
        %s650 = scalar_lea.vmem %s5, %s649
        %p651 = pneg %p192
        %p652 = pneg %p189
        %p653 = scmp.lt.s32.totalorder %s39, 1
        %s654 = scalar_select %p653, %s39, 1
        %s655 = smul.addr %s654, 4
        %s656 = smul.addr %s655, 8
        %s657 = scalar_lea.vmem %s6, %s656
        %p658 = pneg %p218
        %p659 = pneg %p215
        %p660 = scmp.lt.s32.totalorder %s39, 1
        %s661 = scalar_select %p660, %s39, 1
        %s662 = scalar_lea.vmem %s7, %s661
        %p663 = pneg %p244
        %p664 = pneg %p241
        %p665 = scmp.lt.s32.totalorder %s39, 1
        %s666 = scalar_select %p665, %s39, 1
        %s667 = scalar_lea.vmem %s8, %s666
        %p668 = pneg %p270
        %p669 = pneg %p267
        %p670 = scmp.lt.s32.totalorder %s39, 1
        %s671 = scalar_select %p670, %s39, 1
        %s672 = scalar_lea.vmem %s9, %s671
        %p673 = pneg %p296
        %p674 = pneg %p293
        %p675 = scmp.lt.s32.totalorder %s39, 1
        %s676 = scalar_select %p675, %s39, 1
        %s677 = smul.addr %s676, 4
        %s678 = smul.addr %s677, 8
        %s679 = scalar_lea.vmem %s10, %s678
        %p680 = pneg %p322
        %p681 = pneg %p319
        %p682 = scmp.lt.s32.totalorder %s39, 1
        %s683 = scalar_select %p682, %s39, 1
        %s684 = scalar_lea.vmem %s11, %s683
        %p685 = pneg %p348
        %p686 = pneg %p345
        %p687 = scmp.lt.s32.totalorder %s39, 1
        %s688 = scalar_select %p687, %s39, 1
        %s689 = smul.addr %s688, 8
        %s690 = smul.addr %s689, 8
        %s691 = scalar_lea.vmem %s12, %s690
        %p692 = pneg %p374
        %p693 = pneg %p371
        %p694 = scmp.lt.s32.totalorder %s39, 1
        %s695 = scalar_select %p694, %s39, 1
        %s696 = scalar_lea.vmem %s13, %s695
        %p697 = pneg %p400
        %p698 = pneg %p397
        %p699 = pneg %p421
        %p700 = pneg %p418
        %p701 = pneg %p442
        %p702 = pneg %p439
        %p703 = pneg %p468
        %p704 = pneg %p465
        %s705 = sand.u32 %s455, 1
        %s706 = scalar_lea.sflag [#allocation5], %s705
        %s707 = sand.u32 %s455, 1
        %s708 = smul.addr %s707, 8
        %s709 = scalar_lea.vmem [#allocation8], %s708
        %p710 = scmp.lt.s32.totalorder %s39, 1
        %s711 = scalar_select %p710, %s39, 1
        %s712 = scalar_lea.vmem %s2, %s711
        %p713 = scmp.lt.s32.totalorder %s39, 1
        %s714 = scalar_select %p713, %s39, 1
        %s715 = scalar_lea.vmem %s3, %s714
        %p716 = scmp.lt.s32.totalorder %s39, 1
        %s717 = scalar_select %p716, %s39, 1
        %s718 = smul.addr %s717, 4
        %s719 = smul.addr %s718, 8
        %s720 = scalar_lea.vmem %s4, %s719
        %p721 = scmp.lt.s32.totalorder %s39, 1
        %s722 = scalar_select %p721, %s39, 1
        %s723 = scalar_lea.vmem %s5, %s722
        %p724 = scmp.lt.s32.totalorder %s39, 1
        %s725 = scalar_select %p724, %s39, 1
        %s726 = smul.addr %s725, 4
        %s727 = smul.addr %s726, 8
        %s728 = scalar_lea.vmem %s6, %s727
        %p729 = scmp.lt.s32.totalorder %s39, 1
        %s730 = scalar_select %p729, %s39, 1
        %s731 = scalar_lea.vmem %s7, %s730
        %p732 = scmp.lt.s32.totalorder %s39, 1
        %s733 = scalar_select %p732, %s39, 1
        %s734 = scalar_lea.vmem %s8, %s733
        %p735 = scmp.lt.s32.totalorder %s39, 1
        %s736 = scalar_select %p735, %s39, 1
        %s737 = scalar_lea.vmem %s9, %s736
        %p738 = scmp.lt.s32.totalorder %s39, 1
        %s739 = scalar_select %p738, %s39, 1
        %s740 = smul.addr %s739, 4
        %s741 = smul.addr %s740, 8
        %s742 = scalar_lea.vmem %s10, %s741
        %p743 = scmp.lt.s32.totalorder %s39, 1
        %s744 = scalar_select %p743, %s39, 1
        %s745 = scalar_lea.vmem %s11, %s744
        %p746 = scmp.lt.s32.totalorder %s39, 1
        %s747 = scalar_select %p746, %s39, 1
        %s748 = smul.addr %s747, 8
        %s749 = smul.addr %s748, 8
        %s750 = scalar_lea.vmem %s12, %s749
        %p751 = scmp.lt.s32.totalorder %s39, 1
        %s752 = scalar_select %p751, %s39, 1
        %s753 = scalar_lea.vmem %s13, %s752
        %p754 = scmp.eq.s32.totalorder %s39, 0
        // Predicated region
        $region93: #{tpu_custom_call.1} parent=83 // pred_check
          %p755 = pneg %p754
        $region94: #{tpu_custom_call.1} parent=83 // pred_check_branch
          %757 = sbr.rel (%p755) target = $region96
        $region95: #{tpu_custom_call.1} parent=83 // pred_region
          %v758 = vld [vmem:[%s613] sm:$0xff]
          %v759 = vld [vmem:[#allocation6] sm:$0xff]
          %v760 = vadd.f32 %v758, %v759
          %vm761 = vcmask 261120
          %762 = vst.msk [vmem:[#allocation2] sm:$0xff] %vm761, %v760
        $region96: #{tpu_custom_call.1} parent=83 // pred_fallthru
          _
        %v763 = vld [vmem:[#allocation2] sm:$0xff]
        %v764 = vld [vmem:[%s712] sm:$0x1]
        %v765 = vld [vmem:[%s715] sm:$0x1]
        %vm766 = vcmask 261120
        %v767 = vsel %vm766, %v763, 0.0
        %768 = vadd.xlane.f32.xlu0 %v767
        %v769 = vpop.xlane.xlu0 %768
        %v770 = vrcp.pop 32.0
        %v771 = vmul.f32 %v769, %v770
        %v772 = vsub.f32 %v763, %v771
        %v773 = vmul.f32 %v772, %v772
        %v774 = vsel %vm766, %v773, 0.0
        %775 = vadd.xlane.f32.xlu0 %v774
        %v776 = vpop.xlane.xlu0 %775
        %v777 = vmul.f32 %v776, %v770
        %v778 = vadd.f32 %v777, 1e-06
        %v779 = vrsqrt.pop %v778
        %v780 = vmul.f32 %v772, %v779
        %v782 = vlaneseq
        %v783 = vshrl.u32 %v782, 7
        %v784 = vsub.s32 0, %v783
        %v785 = vrot.slane %v764, %v784
        %v787 = vmul.f32 %v780, %v785
        %v789 = vlaneseq
        %v790 = vshrl.u32 %v789, 7
        %v791 = vsub.s32 0, %v790
        %v792 = vrot.slane %v765, %v791
        %v794 = vadd.f32 %v787, %v792
        %v795 = vld [vmem:[%s720] sm:$0xff]
        %v796 = vld [vmem:[%s720 + $0x8] sm:$0xff]
        %v797 = vld [vmem:[%s720 + $0x10] sm:$0xff]
        %v798 = vld [vmem:[%s720 + $0x18] sm:$0xff]
        %v799 = vld [vmem:[%s723] sm:$0x1]
        %v801 = vlaneseq
        %v802 = vshrl.u32 %v801, 7
        %v803 = vsub.s32 0, %v802
        %v804 = vrot.slane %v799, %v803
        %v807 = vsel %vm766, %v794, 0
        %809 = vmatprep.subr.mxu0 0.0
        %810 = vmatpush1.msra.mxu0 %v795
        %811 = vmatprep.subr.mxu0 0.0
        %812 = vmatpush1.msra.mxu0 %v796
        %813 = vmatprep.subr.mxu0 0.0
        %814 = vmatpush1.msra.mxu0 %v797
        %815 = vmatprep.subr.mxu0 0.0
        %816 = vmatpush1.msra.mxu0 %v798
        %817 = vmatprep.subr.mxu0 0.0
        %818 = vmatpush1.msra.mxu0 0.0
        %819 = vmatprep.subr.mxu0 0.0
        %820 = vmatpush1.msra.mxu0 0.0
        %821 = vmatprep.subr.mxu0 0.0
        %822 = vmatpush1.msra.mxu0 0.0
        %823 = vmatprep.subr.mxu0 0.0
        %824 = vmatpush1.msra.mxu0 0.0
        %825 = vmatprep.subr.mxu0 0.0
        %826 = vmatpush1.msra.mxu0 0.0
        %827 = vmatprep.subr.mxu0 0.0
        %828 = vmatpush1.msra.mxu0 0.0
        %829 = vmatprep.subr.mxu0 0.0
        %830 = vmatpush1.msra.mxu0 0.0
        %831 = vmatprep.subr.mxu0 0.0
        %832 = vmatpush1.msra.mxu0 0.0
        %833 = vmatprep.subr.mxu0 0.0
        %834 = vmatpush1.msra.mxu0 0.0
        %835 = vmatprep.subr.mxu0 0.0
        %836 = vmatpush1.msra.mxu0 0.0
        %837 = vmatprep.subr.mxu0 0.0
        %838 = vmatpush1.msra.mxu0 0.0
        %839 = vmatprep.subr.mxu0 0.0
        %840 = vmatpush1.msra.mxu0 0.0
        %841 = vmatprep.subr.mxu0 0.0
        %842 = vmatpush1.msra.mxu0 0.0
        %843 = vmatprep.subr.mxu0 0.0
        %844 = vmatpush1.msra.mxu0 0.0
        %845 = vmatprep.subr.mxu0 0.0
        %846 = vmatpush1.msra.mxu0 0.0
        %847 = vmatprep.subr.mxu0 0.0
        %848 = vmatpush1.msra.mxu0 0.0
        %849 = vmatprep.subr.mxu0 0.0
        %850 = vmatpush1.msra.mxu0 0.0
        %851 = vmatprep.subr.mxu0 0.0
        %852 = vmatpush1.msra.mxu0 0.0
        %853 = vmatprep.subr.mxu0 0.0
        %854 = vmatpush1.msra.mxu0 0.0
        %855 = vmatprep.subr.mxu0 0.0
        %856 = vmatpush1.msra.mxu0 0.0
        %857 = vmatprep.subr.mxu0 0.0
        %858 = vmatpush1.msra.mxu0 0.0
        %859 = vmatprep.subr.mxu0 0.0
        %860 = vmatpush1.msra.mxu0 0.0
        %861 = vmatprep.subr.mxu0 0.0
        %862 = vmatpush1.msra.mxu0 0.0
        %863 = vmatprep.subr.mxu0 0.0
        %864 = vmatpush1.msra.mxu0 0.0
        %865 = vmatprep.subr.mxu0 0.0
        %866 = vmatpush1.msra.mxu0 0.0
        %867 = vmatprep.subr.mxu0 0.0
        %868 = vmatpush1.msra.mxu0 0.0
        %869 = vmatprep.subr.mxu0 0.0
        %870 = vmatpush1.msra.mxu0 0.0
        %871 = vmatprep.subr.mxu0 0.0
        %872 = vmatpush1.msra.mxu0 0.0
        %873 = vmatprep.mubr.f32.mxu0 0.0
        %874 = vmatmul.mubr.f32.gmra.mrb[0].mxu0 %v807
        %v875 = vpop.f32.mrb[0].mxu0
        %v876 = vadd.f32 %v804, %v875
        %v877 = vpop.f32.mrb[0].mxu0
        %878 = vdwg.mxu0
        %880 = vrot.lane.b32.xlu0 %v876, 120
        %v881 = vpop.permute.xlu0 %880
        %883 = vrot.lane.b32.xlu0 %v876, 112
        %v884 = vpop.permute.xlu0 %883
        %886 = vrot.lane.b32.xlu0 %v876, 104
        %v887 = vpop.permute.xlu0 %886
        %v889 = vcombine.low %v876, %v884
        %v890 = vcombine.high %v876, %v884
        %v892 = vunpack.c.l.s4 1983009808
        %v893 = vunpack.c.0.s8 %v892
        %v894 = vlaneseq
        %v895 = vshrl.u32 %v894, 7
        %v896 = vsub.s32 %v893, %v895
        %v897 = vrot.slane %v889, %v896
        %v899 = vunpack.c.l.s4 1983009808
        %v900 = vunpack.c.0.s8 %v899
        %v901 = vlaneseq
        %v902 = vshrl.u32 %v901, 7
        %v903 = vsub.s32 %v900, %v902
        %v904 = vrot.slane %v890, %v903
        %v905 = vcombine.low %v881, %v887
        %v906 = vcombine.high %v881, %v887
        %v908 = vunpack.c.l.s4 1983009808
        %v909 = vunpack.c.0.s8 %v908
        %v910 = vlaneseq
        %v911 = vshrl.u32 %v910, 7
        %v912 = vsub.s32 %v909, %v911
        %v913 = vrot.slane %v905, %v912
        %v915 = vunpack.c.l.s4 1983009808
        %v916 = vunpack.c.0.s8 %v915
        %v917 = vlaneseq
        %v918 = vshrl.u32 %v917, 7
        %v919 = vsub.s32 %v916, %v918
        %v920 = vrot.slane %v906, %v919
        %v921 = vcombine.low %v897, %v913
        %v922 = vcombine.high %v897, %v913
        %v924 = vunpack.c.l.s4 1934713408
        %v925 = vunpack.c.0.s8 %v924
        %v926 = vlaneseq
        %v927 = vshrl.u32 %v926, 7
        %v928 = vsub.s32 %v925, %v927
        %v929 = vrot.slane %v921, %v928
        %v931 = vunpack.c.l.s4 1934713408
        %v932 = vunpack.c.0.s8 %v931
        %v933 = vlaneseq
        %v934 = vshrl.u32 %v933, 7
        %v935 = vsub.s32 %v932, %v934
        %v936 = vrot.slane %v922, %v935
        %v937 = vcombine.low %v904, %v920
        %v938 = vcombine.high %v904, %v920
        %v940 = vunpack.c.l.s4 1934713408
        %v941 = vunpack.c.0.s8 %v940
        %v942 = vlaneseq
        %v943 = vshrl.u32 %v942, 7
        %v944 = vsub.s32 %v941, %v943
        %v945 = vrot.slane %v937, %v944
        %v947 = vunpack.c.l.s4 1934713408
        %v948 = vunpack.c.0.s8 %v947
        %v949 = vlaneseq
        %v950 = vshrl.u32 %v949, 7
        %v951 = vsub.s32 %v948, %v950
        %v952 = vrot.slane %v938, %v951
        %v953 = vcombine.high %v929, 0.0
        %v954 = vcombine.high %v936, 0.0
        %v955 = vcombine.high %v945, 0.0
        %v956 = vcombine.high %v952, 0.0
        %v957 = vcombine.low %v929, %v936
        %v959 = vunpack.c.l.s4 1983009808
        %v960 = vunpack.c.0.s8 %v959
        %v961 = vlaneseq
        %v962 = vshrl.u32 %v961, 7
        %v963 = vsub.s32 %v960, %v962
        %v964 = vrot.slane %v957, %v963
        %v965 = vcombine.low %v953, %v954
        %v967 = vunpack.c.l.s4 1983009808
        %v968 = vunpack.c.0.s8 %v967
        %v969 = vlaneseq
        %v970 = vshrl.u32 %v969, 7
        %v971 = vsub.s32 %v968, %v970
        %v972 = vrot.slane %v965, %v971
        %v973 = vcombine.low %v945, %v952
        %v975 = vunpack.c.l.s4 1983009808
        %v976 = vunpack.c.0.s8 %v975
        %v977 = vlaneseq
        %v978 = vshrl.u32 %v977, 7
        %v979 = vsub.s32 %v976, %v978
        %v980 = vrot.slane %v973, %v979
        %v981 = vcombine.low %v955, %v956
        %v983 = vunpack.c.l.s4 1983009808
        %v984 = vunpack.c.0.s8 %v983
        %v985 = vlaneseq
        %v986 = vshrl.u32 %v985, 7
        %v987 = vsub.s32 %v984, %v986
        %v988 = vrot.slane %v981, %v987
        %v989 = vcombine.low %v964, %v972
        %v990 = vcombine.high %v964, %v972
        %v992 = vunpack.c.l.s4 1934713408
        %v993 = vunpack.c.0.s8 %v992
        %v994 = vlaneseq
        %v995 = vshrl.u32 %v994, 7
        %v996 = vsub.s32 %v993, %v995
        %v997 = vrot.slane %v989, %v996
        %v999 = vunpack.c.l.s4 1934713408
        %v1000 = vunpack.c.0.s8 %v999
        %v1001 = vlaneseq
        %v1002 = vshrl.u32 %v1001, 7
        %v1003 = vsub.s32 %v1000, %v1002
        %v1004 = vrot.slane %v990, %v1003
        %v1005 = vcombine.low %v980, %v988
        %v1006 = vcombine.high %v980, %v988
        %v1008 = vunpack.c.l.s4 1934713408
        %v1009 = vunpack.c.0.s8 %v1008
        %v1010 = vlaneseq
        %v1011 = vshrl.u32 %v1010, 7
        %v1012 = vsub.s32 %v1009, %v1011
        %v1013 = vrot.slane %v1005, %v1012
        %v1015 = vunpack.c.l.s4 1934713408
        %v1016 = vunpack.c.0.s8 %v1015
        %v1017 = vlaneseq
        %v1018 = vshrl.u32 %v1017, 7
        %v1019 = vsub.s32 %v1016, %v1018
        %v1020 = vrot.slane %v1006, %v1019
        %v1021 = vcombine.low %v997, %v1013
        %v1022 = vcombine.high %v997, %v1013
        %v1023 = vcombine.low %v1004, %v1020
        %v1024 = vcombine.high %v1004, %v1020
        %1025 = vrot.lane.b32.xlu0 %v876, 96
        %v1026 = vpop.permute.xlu0 %1025
        %1027 = vrot.lane.b32.xlu0 %v881, 96
        %v1028 = vpop.permute.xlu0 %1027
        %1029 = vrot.lane.b32.xlu0 %v884, 96
        %v1030 = vpop.permute.xlu0 %1029
        %1031 = vrot.lane.b32.xlu0 %v887, 96
        %v1032 = vpop.permute.xlu0 %1031
        %v1037 = vcombine.low %v1026, %v1030
        %v1038 = vcombine.high %v1026, %v1030
        %v1040 = vunpack.c.l.s4 1983009808
        %v1041 = vunpack.c.0.s8 %v1040
        %v1042 = vlaneseq
        %v1043 = vshrl.u32 %v1042, 7
        %v1044 = vsub.s32 %v1041, %v1043
        %v1045 = vrot.slane %v1037, %v1044
        %v1047 = vunpack.c.l.s4 1983009808
        %v1048 = vunpack.c.0.s8 %v1047
        %v1049 = vlaneseq
        %v1050 = vshrl.u32 %v1049, 7
        %v1051 = vsub.s32 %v1048, %v1050
        %v1052 = vrot.slane %v1038, %v1051
        %v1053 = vcombine.low %v1028, %v1032
        %v1054 = vcombine.high %v1028, %v1032
        %v1056 = vunpack.c.l.s4 1983009808
        %v1057 = vunpack.c.0.s8 %v1056
        %v1058 = vlaneseq
        %v1059 = vshrl.u32 %v1058, 7
        %v1060 = vsub.s32 %v1057, %v1059
        %v1061 = vrot.slane %v1053, %v1060
        %v1063 = vunpack.c.l.s4 1983009808
        %v1064 = vunpack.c.0.s8 %v1063
        %v1065 = vlaneseq
        %v1066 = vshrl.u32 %v1065, 7
        %v1067 = vsub.s32 %v1064, %v1066
        %v1068 = vrot.slane %v1054, %v1067
        %v1069 = vcombine.low %v1045, %v1061
        %v1070 = vcombine.high %v1045, %v1061
        %v1072 = vunpack.c.l.s4 1934713408
        %v1073 = vunpack.c.0.s8 %v1072
        %v1074 = vlaneseq
        %v1075 = vshrl.u32 %v1074, 7
        %v1076 = vsub.s32 %v1073, %v1075
        %v1077 = vrot.slane %v1069, %v1076
        %v1079 = vunpack.c.l.s4 1934713408
        %v1080 = vunpack.c.0.s8 %v1079
        %v1081 = vlaneseq
        %v1082 = vshrl.u32 %v1081, 7
        %v1083 = vsub.s32 %v1080, %v1082
        %v1084 = vrot.slane %v1070, %v1083
        %v1085 = vcombine.low %v1052, %v1068
        %v1086 = vcombine.high %v1052, %v1068
        %v1088 = vunpack.c.l.s4 1934713408
        %v1089 = vunpack.c.0.s8 %v1088
        %v1090 = vlaneseq
        %v1091 = vshrl.u32 %v1090, 7
        %v1092 = vsub.s32 %v1089, %v1091
        %v1093 = vrot.slane %v1085, %v1092
        %v1095 = vunpack.c.l.s4 1934713408
        %v1096 = vunpack.c.0.s8 %v1095
        %v1097 = vlaneseq
        %v1098 = vshrl.u32 %v1097, 7
        %v1099 = vsub.s32 %v1096, %v1098
        %v1100 = vrot.slane %v1086, %v1099
        %v1101 = vcombine.high %v1077, 0.0
        %v1102 = vcombine.high %v1084, 0.0
        %v1103 = vcombine.high %v1093, 0.0
        %v1104 = vcombine.high %v1100, 0.0
        %v1105 = vcombine.low %v1077, %v1084
        %v1107 = vunpack.c.l.s4 1983009808
        %v1108 = vunpack.c.0.s8 %v1107
        %v1109 = vlaneseq
        %v1110 = vshrl.u32 %v1109, 7
        %v1111 = vsub.s32 %v1108, %v1110
        %v1112 = vrot.slane %v1105, %v1111
        %v1113 = vcombine.low %v1101, %v1102
        %v1115 = vunpack.c.l.s4 1983009808
        %v1116 = vunpack.c.0.s8 %v1115
        %v1117 = vlaneseq
        %v1118 = vshrl.u32 %v1117, 7
        %v1119 = vsub.s32 %v1116, %v1118
        %v1120 = vrot.slane %v1113, %v1119
        %v1121 = vcombine.low %v1093, %v1100
        %v1123 = vunpack.c.l.s4 1983009808
        %v1124 = vunpack.c.0.s8 %v1123
        %v1125 = vlaneseq
        %v1126 = vshrl.u32 %v1125, 7
        %v1127 = vsub.s32 %v1124, %v1126
        %v1128 = vrot.slane %v1121, %v1127
        %v1129 = vcombine.low %v1103, %v1104
        %v1131 = vunpack.c.l.s4 1983009808
        %v1132 = vunpack.c.0.s8 %v1131
        %v1133 = vlaneseq
        %v1134 = vshrl.u32 %v1133, 7
        %v1135 = vsub.s32 %v1132, %v1134
        %v1136 = vrot.slane %v1129, %v1135
        %v1137 = vcombine.low %v1112, %v1120
        %v1138 = vcombine.high %v1112, %v1120
        %v1140 = vunpack.c.l.s4 1934713408
        %v1141 = vunpack.c.0.s8 %v1140
        %v1142 = vlaneseq
        %v1143 = vshrl.u32 %v1142, 7
        %v1144 = vsub.s32 %v1141, %v1143
        %v1145 = vrot.slane %v1137, %v1144
        %v1147 = vunpack.c.l.s4 1934713408
        %v1148 = vunpack.c.0.s8 %v1147
        %v1149 = vlaneseq
        %v1150 = vshrl.u32 %v1149, 7
        %v1151 = vsub.s32 %v1148, %v1150
        %v1152 = vrot.slane %v1138, %v1151
        %v1153 = vcombine.low %v1128, %v1136
        %v1154 = vcombine.high %v1128, %v1136
        %v1156 = vunpack.c.l.s4 1934713408
        %v1157 = vunpack.c.0.s8 %v1156
        %v1158 = vlaneseq
        %v1159 = vshrl.u32 %v1158, 7
        %v1160 = vsub.s32 %v1157, %v1159
        %v1161 = vrot.slane %v1153, %v1160
        %v1163 = vunpack.c.l.s4 1934713408
        %v1164 = vunpack.c.0.s8 %v1163
        %v1165 = vlaneseq
        %v1166 = vshrl.u32 %v1165, 7
        %v1167 = vsub.s32 %v1164, %v1166
        %v1168 = vrot.slane %v1154, %v1167
        %v1169 = vcombine.low %v1145, %v1161
        %v1170 = vcombine.high %v1145, %v1161
        %v1171 = vcombine.low %v1152, %v1168
        %v1172 = vcombine.high %v1152, %v1168
        %1173 = vrot.lane.b32.xlu0 %v876, 64
        %v1174 = vpop.permute.xlu0 %1173
        %1175 = vrot.lane.b32.xlu0 %v881, 64
        %v1176 = vpop.permute.xlu0 %1175
        %1177 = vrot.lane.b32.xlu0 %v884, 64
        %v1178 = vpop.permute.xlu0 %1177
        %1179 = vrot.lane.b32.xlu0 %v887, 64
        %v1180 = vpop.permute.xlu0 %1179
        %v1185 = vcombine.low %v1174, %v1178
        %v1186 = vcombine.high %v1174, %v1178
        %v1188 = vunpack.c.l.s4 1983009808
        %v1189 = vunpack.c.0.s8 %v1188
        %v1190 = vlaneseq
        %v1191 = vshrl.u32 %v1190, 7
        %v1192 = vsub.s32 %v1189, %v1191
        %v1193 = vrot.slane %v1185, %v1192
        %v1195 = vunpack.c.l.s4 1983009808
        %v1196 = vunpack.c.0.s8 %v1195
        %v1197 = vlaneseq
        %v1198 = vshrl.u32 %v1197, 7
        %v1199 = vsub.s32 %v1196, %v1198
        %v1200 = vrot.slane %v1186, %v1199
        %v1201 = vcombine.low %v1176, %v1180
        %v1202 = vcombine.high %v1176, %v1180
        %v1204 = vunpack.c.l.s4 1983009808
        %v1205 = vunpack.c.0.s8 %v1204
        %v1206 = vlaneseq
        %v1207 = vshrl.u32 %v1206, 7
        %v1208 = vsub.s32 %v1205, %v1207
        %v1209 = vrot.slane %v1201, %v1208
        %v1211 = vunpack.c.l.s4 1983009808
        %v1212 = vunpack.c.0.s8 %v1211
        %v1213 = vlaneseq
        %v1214 = vshrl.u32 %v1213, 7
        %v1215 = vsub.s32 %v1212, %v1214
        %v1216 = vrot.slane %v1202, %v1215
        %v1217 = vcombine.low %v1193, %v1209
        %v1218 = vcombine.high %v1193, %v1209
        %v1220 = vunpack.c.l.s4 1934713408
        %v1221 = vunpack.c.0.s8 %v1220
        %v1222 = vlaneseq
        %v1223 = vshrl.u32 %v1222, 7
        %v1224 = vsub.s32 %v1221, %v1223
        %v1225 = vrot.slane %v1217, %v1224
        %v1227 = vunpack.c.l.s4 1934713408
        %v1228 = vunpack.c.0.s8 %v1227
        %v1229 = vlaneseq
        %v1230 = vshrl.u32 %v1229, 7
        %v1231 = vsub.s32 %v1228, %v1230
        %v1232 = vrot.slane %v1218, %v1231
        %v1233 = vcombine.low %v1200, %v1216
        %v1234 = vcombine.high %v1200, %v1216
        %v1236 = vunpack.c.l.s4 1934713408
        %v1237 = vunpack.c.0.s8 %v1236
        %v1238 = vlaneseq
        %v1239 = vshrl.u32 %v1238, 7
        %v1240 = vsub.s32 %v1237, %v1239
        %v1241 = vrot.slane %v1233, %v1240
        %v1243 = vunpack.c.l.s4 1934713408
        %v1244 = vunpack.c.0.s8 %v1243
        %v1245 = vlaneseq
        %v1246 = vshrl.u32 %v1245, 7
        %v1247 = vsub.s32 %v1244, %v1246
        %v1248 = vrot.slane %v1234, %v1247
        %v1249 = vcombine.high %v1225, 0.0
        %v1250 = vcombine.high %v1232, 0.0
        %v1251 = vcombine.high %v1241, 0.0
        %v1252 = vcombine.high %v1248, 0.0
        %v1253 = vcombine.low %v1225, %v1232
        %v1255 = vunpack.c.l.s4 1983009808
        %v1256 = vunpack.c.0.s8 %v1255
        %v1257 = vlaneseq
        %v1258 = vshrl.u32 %v1257, 7
        %v1259 = vsub.s32 %v1256, %v1258
        %v1260 = vrot.slane %v1253, %v1259
        %v1261 = vcombine.low %v1249, %v1250
        %v1263 = vunpack.c.l.s4 1983009808
        %v1264 = vunpack.c.0.s8 %v1263
        %v1265 = vlaneseq
        %v1266 = vshrl.u32 %v1265, 7
        %v1267 = vsub.s32 %v1264, %v1266
        %v1268 = vrot.slane %v1261, %v1267
        %v1269 = vcombine.low %v1241, %v1248
        %v1271 = vunpack.c.l.s4 1983009808
        %v1272 = vunpack.c.0.s8 %v1271
        %v1273 = vlaneseq
        %v1274 = vshrl.u32 %v1273, 7
        %v1275 = vsub.s32 %v1272, %v1274
        %v1276 = vrot.slane %v1269, %v1275
        %v1277 = vcombine.low %v1251, %v1252
        %v1279 = vunpack.c.l.s4 1983009808
        %v1280 = vunpack.c.0.s8 %v1279
        %v1281 = vlaneseq
        %v1282 = vshrl.u32 %v1281, 7
        %v1283 = vsub.s32 %v1280, %v1282
        %v1284 = vrot.slane %v1277, %v1283
        %v1285 = vcombine.low %v1260, %v1268
        %v1286 = vcombine.high %v1260, %v1268
        %v1288 = vunpack.c.l.s4 1934713408
        %v1289 = vunpack.c.0.s8 %v1288
        %v1290 = vlaneseq
        %v1291 = vshrl.u32 %v1290, 7
        %v1292 = vsub.s32 %v1289, %v1291
        %v1293 = vrot.slane %v1285, %v1292
        %v1295 = vunpack.c.l.s4 1934713408
        %v1296 = vunpack.c.0.s8 %v1295
        %v1297 = vlaneseq
        %v1298 = vshrl.u32 %v1297, 7
        %v1299 = vsub.s32 %v1296, %v1298
        %v1300 = vrot.slane %v1286, %v1299
        %v1301 = vcombine.low %v1276, %v1284
        %v1302 = vcombine.high %v1276, %v1284
        %v1304 = vunpack.c.l.s4 1934713408
        %v1305 = vunpack.c.0.s8 %v1304
        %v1306 = vlaneseq
        %v1307 = vshrl.u32 %v1306, 7
        %v1308 = vsub.s32 %v1305, %v1307
        %v1309 = vrot.slane %v1301, %v1308
        %v1311 = vunpack.c.l.s4 1934713408
        %v1312 = vunpack.c.0.s8 %v1311
        %v1313 = vlaneseq
        %v1314 = vshrl.u32 %v1313, 7
        %v1315 = vsub.s32 %v1312, %v1314
        %v1316 = vrot.slane %v1302, %v1315
        %v1317 = vcombine.low %v1293, %v1309
        %v1318 = vcombine.high %v1293, %v1309
        %v1319 = vcombine.low %v1300, %v1316
        %v1320 = vcombine.high %v1300, %v1316
        %vm1321 = vcmask 64512
        %v1323 = vsel %vm1321, %v1021, 0
        %v1326 = vsel %vm1321, %v1169, 0
        %1328 = vmatprep.subr.mxu0 0.0
        %1329 = vmatpush1.xpose.msra.mxu0 %v1326
        %1330 = vmatprep.subr.mxu0 0.0
        %1331 = vmatpush1.xpose.msra.mxu0 0.0
        %1332 = vmatprep.subr.mxu0 0.0
        %1333 = vmatpush1.xpose.msra.mxu0 0.0
        %1334 = vmatprep.subr.mxu0 0.0
        %1335 = vmatpush1.xpose.msra.mxu0 0.0
        %1336 = vmatprep.subr.mxu0 0.0
        %1337 = vmatpush1.xpose.msra.mxu0 0.0
        %1338 = vmatprep.subr.mxu0 0.0
        %1339 = vmatpush1.xpose.msra.mxu0 0.0
        %1340 = vmatprep.subr.mxu0 0.0
        %1341 = vmatpush1.xpose.msra.mxu0 0.0
        %1342 = vmatprep.subr.mxu0 0.0
        %1343 = vmatpush1.xpose.msra.mxu0 0.0
        %1344 = vmatprep.subr.mxu0 0.0
        %1345 = vmatpush1.xpose.msra.mxu0 0.0
        %1346 = vmatprep.subr.mxu0 0.0
        %1347 = vmatpush1.xpose.msra.mxu0 0.0
        %1348 = vmatprep.subr.mxu0 0.0
        %1349 = vmatpush1.xpose.msra.mxu0 0.0
        %1350 = vmatprep.subr.mxu0 0.0
        %1351 = vmatpush1.xpose.msra.mxu0 0.0
        %1352 = vmatprep.subr.mxu0 0.0
        %1353 = vmatpush1.xpose.msra.mxu0 0.0
        %1354 = vmatprep.subr.mxu0 0.0
        %1355 = vmatpush1.xpose.msra.mxu0 0.0
        %1356 = vmatprep.subr.mxu0 0.0
        %1357 = vmatpush1.xpose.msra.mxu0 0.0
        %1358 = vmatprep.subr.mxu0 0.0
        %1359 = vmatpush1.xpose.msra.mxu0 0.0
        %1360 = vmatprep.subr.mxu0 0.0
        %1361 = vmatpush1.xpose.msra.mxu0 0.0
        %1362 = vmatprep.subr.mxu0 0.0
        %1363 = vmatpush1.xpose.msra.mxu0 0.0
        %1364 = vmatprep.subr.mxu0 0.0
        %1365 = vmatpush1.xpose.msra.mxu0 0.0
        %1366 = vmatprep.subr.mxu0 0.0
        %1367 = vmatpush1.xpose.msra.mxu0 0.0
        %1368 = vmatprep.subr.mxu0 0.0
        %1369 = vmatpush1.xpose.msra.mxu0 0.0
        %1370 = vmatprep.subr.mxu0 0.0
        %1371 = vmatpush1.xpose.msra.mxu0 0.0
        %1372 = vmatprep.subr.mxu0 0.0
        %1373 = vmatpush1.xpose.msra.mxu0 0.0
        %1374 = vmatprep.subr.mxu0 0.0
        %1375 = vmatpush1.xpose.msra.mxu0 0.0
        %1376 = vmatprep.subr.mxu0 0.0
        %1377 = vmatpush1.xpose.msra.mxu0 0.0
        %1378 = vmatprep.subr.mxu0 0.0
        %1379 = vmatpush1.xpose.msra.mxu0 0.0
        %1380 = vmatprep.subr.mxu0 0.0
        %1381 = vmatpush1.xpose.msra.mxu0 0.0
        %1382 = vmatprep.subr.mxu0 0.0
        %1383 = vmatpush1.xpose.msra.mxu0 0.0
        %1384 = vmatprep.subr.mxu0 0.0
        %1385 = vmatpush1.xpose.msra.mxu0 0.0
        %1386 = vmatprep.subr.mxu0 0.0
        %1387 = vmatpush1.xpose.msra.mxu0 0.0
        %1388 = vmatprep.subr.mxu0 0.0
        %1389 = vmatpush1.xpose.msra.mxu0 0.0
        %1390 = vmatprep.subr.mxu0 0.0
        %1391 = vmatpush1.xpose.msra.mxu0 0.0
        %1392 = vmatprep.mubr.f32.mxu0 0.0
        %1393 = vmatmul.mubr.f32.gmra.mrb[0].mxu0 %v1323
        %v1394 = vpop.f32.mrb[0].mxu0
        %v1395 = vadd.f32 0.0, %v1394
        %v1396 = vpop.f32.mrb[0].mxu0
        %1397 = vdwg.mxu0
        %v1399 = vsel %vm1321, %v1022, 0
        %v1402 = vsel %vm1321, %v1170, 0
        %1404 = vmatprep.subr.mxu0 0.0
        %1405 = vmatpush1.xpose.msra.mxu0 %v1402
        %1406 = vmatprep.subr.mxu0 0.0
        %1407 = vmatpush1.xpose.msra.mxu0 0.0
        %1408 = vmatprep.subr.mxu0 0.0
        %1409 = vmatpush1.xpose.msra.mxu0 0.0
        %1410 = vmatprep.subr.mxu0 0.0
        %1411 = vmatpush1.xpose.msra.mxu0 0.0
        %1412 = vmatprep.subr.mxu0 0.0
        %1413 = vmatpush1.xpose.msra.mxu0 0.0
        %1414 = vmatprep.subr.mxu0 0.0
        %1415 = vmatpush1.xpose.msra.mxu0 0.0
        %1416 = vmatprep.subr.mxu0 0.0
        %1417 = vmatpush1.xpose.msra.mxu0 0.0
        %1418 = vmatprep.subr.mxu0 0.0
        %1419 = vmatpush1.xpose.msra.mxu0 0.0
        %1420 = vmatprep.subr.mxu0 0.0
        %1421 = vmatpush1.xpose.msra.mxu0 0.0
        %1422 = vmatprep.subr.mxu0 0.0
        %1423 = vmatpush1.xpose.msra.mxu0 0.0
        %1424 = vmatprep.subr.mxu0 0.0
        %1425 = vmatpush1.xpose.msra.mxu0 0.0
        %1426 = vmatprep.subr.mxu0 0.0
        %1427 = vmatpush1.xpose.msra.mxu0 0.0
        %1428 = vmatprep.subr.mxu0 0.0
        %1429 = vmatpush1.xpose.msra.mxu0 0.0
        %1430 = vmatprep.subr.mxu0 0.0
        %1431 = vmatpush1.xpose.msra.mxu0 0.0
        %1432 = vmatprep.subr.mxu0 0.0
        %1433 = vmatpush1.xpose.msra.mxu0 0.0
        %1434 = vmatprep.subr.mxu0 0.0
        %1435 = vmatpush1.xpose.msra.mxu0 0.0
        %1436 = vmatprep.subr.mxu0 0.0
        %1437 = vmatpush1.xpose.msra.mxu0 0.0
        %1438 = vmatprep.subr.mxu0 0.0
        %1439 = vmatpush1.xpose.msra.mxu0 0.0
        %1440 = vmatprep.subr.mxu0 0.0
        %1441 = vmatpush1.xpose.msra.mxu0 0.0
        %1442 = vmatprep.subr.mxu0 0.0
        %1443 = vmatpush1.xpose.msra.mxu0 0.0
        %1444 = vmatprep.subr.mxu0 0.0
        %1445 = vmatpush1.xpose.msra.mxu0 0.0
        %1446 = vmatprep.subr.mxu0 0.0
        %1447 = vmatpush1.xpose.msra.mxu0 0.0
        %1448 = vmatprep.subr.mxu0 0.0
        %1449 = vmatpush1.xpose.msra.mxu0 0.0
        %1450 = vmatprep.subr.mxu0 0.0
        %1451 = vmatpush1.xpose.msra.mxu0 0.0
        %1452 = vmatprep.subr.mxu0 0.0
        %1453 = vmatpush1.xpose.msra.mxu0 0.0
        %1454 = vmatprep.subr.mxu0 0.0
        %1455 = vmatpush1.xpose.msra.mxu0 0.0
        %1456 = vmatprep.subr.mxu0 0.0
        %1457 = vmatpush1.xpose.msra.mxu0 0.0
        %1458 = vmatprep.subr.mxu0 0.0
        %1459 = vmatpush1.xpose.msra.mxu0 0.0
        %1460 = vmatprep.subr.mxu0 0.0
        %1461 = vmatpush1.xpose.msra.mxu0 0.0
        %1462 = vmatprep.subr.mxu0 0.0
        %1463 = vmatpush1.xpose.msra.mxu0 0.0
        %1464 = vmatprep.subr.mxu0 0.0
        %1465 = vmatpush1.xpose.msra.mxu0 0.0
        %1466 = vmatprep.subr.mxu0 0.0
        %1467 = vmatpush1.xpose.msra.mxu0 0.0
        %1468 = vmatprep.mubr.f32.mxu0 0.0
        %1469 = vmatmul.mubr.f32.gmra.mrb[0].mxu0 %v1399
        %v1470 = vpop.f32.mrb[0].mxu0
        %v1471 = vadd.f32 0.0, %v1470
        %v1472 = vpop.f32.mrb[0].mxu0
        %1473 = vdwg.mxu0
        %v1475 = vsel %vm1321, %v1023, 0
        %v1478 = vsel %vm1321, %v1171, 0
        %1480 = vmatprep.subr.mxu0 0.0
        %1481 = vmatpush1.xpose.msra.mxu0 %v1478
        %1482 = vmatprep.subr.mxu0 0.0
        %1483 = vmatpush1.xpose.msra.mxu0 0.0
        %1484 = vmatprep.subr.mxu0 0.0
        %1485 = vmatpush1.xpose.msra.mxu0 0.0
        %1486 = vmatprep.subr.mxu0 0.0
        %1487 = vmatpush1.xpose.msra.mxu0 0.0
        %1488 = vmatprep.subr.mxu0 0.0
        %1489 = vmatpush1.xpose.msra.mxu0 0.0
        %1490 = vmatprep.subr.mxu0 0.0
        %1491 = vmatpush1.xpose.msra.mxu0 0.0
        %1492 = vmatprep.subr.mxu0 0.0
        %1493 = vmatpush1.xpose.msra.mxu0 0.0
        %1494 = vmatprep.subr.mxu0 0.0
        %1495 = vmatpush1.xpose.msra.mxu0 0.0
        %1496 = vmatprep.subr.mxu0 0.0
        %1497 = vmatpush1.xpose.msra.mxu0 0.0
        %1498 = vmatprep.subr.mxu0 0.0
        %1499 = vmatpush1.xpose.msra.mxu0 0.0
        %1500 = vmatprep.subr.mxu0 0.0
        %1501 = vmatpush1.xpose.msra.mxu0 0.0
        %1502 = vmatprep.subr.mxu0 0.0
        %1503 = vmatpush1.xpose.msra.mxu0 0.0
        %1504 = vmatprep.subr.mxu0 0.0
        %1505 = vmatpush1.xpose.msra.mxu0 0.0
        %1506 = vmatprep.subr.mxu0 0.0
        %1507 = vmatpush1.xpose.msra.mxu0 0.0
        %1508 = vmatprep.subr.mxu0 0.0
        %1509 = vmatpush1.xpose.msra.mxu0 0.0
        %1510 = vmatprep.subr.mxu0 0.0
        %1511 = vmatpush1.xpose.msra.mxu0 0.0
        %1512 = vmatprep.subr.mxu0 0.0
        %1513 = vmatpush1.xpose.msra.mxu0 0.0
        %1514 = vmatprep.subr.mxu0 0.0
        %1515 = vmatpush1.xpose.msra.mxu0 0.0
        %1516 = vmatprep.subr.mxu0 0.0
        %1517 = vmatpush1.xpose.msra.mxu0 0.0
        %1518 = vmatprep.subr.mxu0 0.0
        %1519 = vmatpush1.xpose.msra.mxu0 0.0
        %1520 = vmatprep.subr.mxu0 0.0
        %1521 = vmatpush1.xpose.msra.mxu0 0.0
        %1522 = vmatprep.subr.mxu0 0.0
        %1523 = vmatpush1.xpose.msra.mxu0 0.0
        %1524 = vmatprep.subr.mxu0 0.0
        %1525 = vmatpush1.xpose.msra.mxu0 0.0
        %1526 = vmatprep.subr.mxu0 0.0
        %1527 = vmatpush1.xpose.msra.mxu0 0.0
        %1528 = vmatprep.subr.mxu0 0.0
        %1529 = vmatpush1.xpose.msra.mxu0 0.0
        %1530 = vmatprep.subr.mxu0 0.0
        %1531 = vmatpush1.xpose.msra.mxu0 0.0
        %1532 = vmatprep.subr.mxu0 0.0
        %1533 = vmatpush1.xpose.msra.mxu0 0.0
        %1534 = vmatprep.subr.mxu0 0.0
        %1535 = vmatpush1.xpose.msra.mxu0 0.0
        %1536 = vmatprep.subr.mxu0 0.0
        %1537 = vmatpush1.xpose.msra.mxu0 0.0
        %1538 = vmatprep.subr.mxu0 0.0
        %1539 = vmatpush1.xpose.msra.mxu0 0.0
        %1540 = vmatprep.subr.mxu0 0.0
        %1541 = vmatpush1.xpose.msra.mxu0 0.0
        %1542 = vmatprep.subr.mxu0 0.0
        %1543 = vmatpush1.xpose.msra.mxu0 0.0
        %1544 = vmatprep.mubr.f32.mxu0 0.0
        %1545 = vmatmul.mubr.f32.gmra.mrb[0].mxu0 %v1475
        %v1546 = vpop.f32.mrb[0].mxu0
        %v1547 = vadd.f32 0.0, %v1546
        %v1548 = vpop.f32.mrb[0].mxu0
        %1549 = vdwg.mxu0
        %v1551 = vsel %vm1321, %v1024, 0
        %v1554 = vsel %vm1321, %v1172, 0
        %1556 = vmatprep.subr.mxu0 0.0
        %1557 = vmatpush1.xpose.msra.mxu0 %v1554
        %1558 = vmatprep.subr.mxu0 0.0
        %1559 = vmatpush1.xpose.msra.mxu0 0.0
        %1560 = vmatprep.subr.mxu0 0.0
        %1561 = vmatpush1.xpose.msra.mxu0 0.0
        %1562 = vmatprep.subr.mxu0 0.0
        %1563 = vmatpush1.xpose.msra.mxu0 0.0
        %1564 = vmatprep.subr.mxu0 0.0
        %1565 = vmatpush1.xpose.msra.mxu0 0.0
        %1566 = vmatprep.subr.mxu0 0.0
        %1567 = vmatpush1.xpose.msra.mxu0 0.0
        %1568 = vmatprep.subr.mxu0 0.0
        %1569 = vmatpush1.xpose.msra.mxu0 0.0
        %1570 = vmatprep.subr.mxu0 0.0
        %1571 = vmatpush1.xpose.msra.mxu0 0.0
        %1572 = vmatprep.subr.mxu0 0.0
        %1573 = vmatpush1.xpose.msra.mxu0 0.0
        %1574 = vmatprep.subr.mxu0 0.0
        %1575 = vmatpush1.xpose.msra.mxu0 0.0
        %1576 = vmatprep.subr.mxu0 0.0
        %1577 = vmatpush1.xpose.msra.mxu0 0.0
        %1578 = vmatprep.subr.mxu0 0.0
        %1579 = vmatpush1.xpose.msra.mxu0 0.0
        %1580 = vmatprep.subr.mxu0 0.0
        %1581 = vmatpush1.xpose.msra.mxu0 0.0
        %1582 = vmatprep.subr.mxu0 0.0
        %1583 = vmatpush1.xpose.msra.mxu0 0.0
        %1584 = vmatprep.subr.mxu0 0.0
        %1585 = vmatpush1.xpose.msra.mxu0 0.0
        %1586 = vmatprep.subr.mxu0 0.0
        %1587 = vmatpush1.xpose.msra.mxu0 0.0
        %1588 = vmatprep.subr.mxu0 0.0
        %1589 = vmatpush1.xpose.msra.mxu0 0.0
        %1590 = vmatprep.subr.mxu0 0.0
        %1591 = vmatpush1.xpose.msra.mxu0 0.0
        %1592 = vmatprep.subr.mxu0 0.0
        %1593 = vmatpush1.xpose.msra.mxu0 0.0
        %1594 = vmatprep.subr.mxu0 0.0
        %1595 = vmatpush1.xpose.msra.mxu0 0.0
        %1596 = vmatprep.subr.mxu0 0.0
        %1597 = vmatpush1.xpose.msra.mxu0 0.0
        %1598 = vmatprep.subr.mxu0 0.0
        %1599 = vmatpush1.xpose.msra.mxu0 0.0
        %1600 = vmatprep.subr.mxu0 0.0
        %1601 = vmatpush1.xpose.msra.mxu0 0.0
        %1602 = vmatprep.subr.mxu0 0.0
        %1603 = vmatpush1.xpose.msra.mxu0 0.0
        %1604 = vmatprep.subr.mxu0 0.0
        %1605 = vmatpush1.xpose.msra.mxu0 0.0
        %1606 = vmatprep.subr.mxu0 0.0
        %1607 = vmatpush1.xpose.msra.mxu0 0.0
        %1608 = vmatprep.subr.mxu0 0.0
        %1609 = vmatpush1.xpose.msra.mxu0 0.0
        %1610 = vmatprep.subr.mxu0 0.0
        %1611 = vmatpush1.xpose.msra.mxu0 0.0
        %1612 = vmatprep.subr.mxu0 0.0
        %1613 = vmatpush1.xpose.msra.mxu0 0.0
        %1614 = vmatprep.subr.mxu0 0.0
        %1615 = vmatpush1.xpose.msra.mxu0 0.0
        %1616 = vmatprep.subr.mxu0 0.0
        %1617 = vmatpush1.xpose.msra.mxu0 0.0
        %1618 = vmatprep.subr.mxu0 0.0
        %1619 = vmatpush1.xpose.msra.mxu0 0.0
        %1620 = vmatprep.mubr.f32.mxu0 0.0
        %1621 = vmatmul.mubr.f32.gmra.mrb[0].mxu0 %v1551
        %v1622 = vpop.f32.mrb[0].mxu0
        %v1623 = vadd.f32 0.0, %v1622
        %v1624 = vpop.f32.mrb[0].mxu0
        %1625 = vdwg.mxu0
        %v1626 = vsel %vm1321, %v1395, -inf
        %1627 = vmax.xlane.f32.xlu0 %v1626
        %v1628 = vpop.xlane.xlu0 %1627
        %v1629 = vsel %vm1321, %v1471, -inf
        %1630 = vmax.xlane.f32.xlu0 %v1629
        %v1631 = vpop.xlane.xlu0 %1630
        %v1632 = vsel %vm1321, %v1547, -inf
        %1633 = vmax.xlane.f32.xlu0 %v1632
        %v1634 = vpop.xlane.xlu0 %1633
        %v1635 = vsel %vm1321, %v1623, -inf
        %1636 = vmax.xlane.f32.xlu0 %v1635
        %v1637 = vpop.xlane.xlu0 %1636
        %v1638 = vsub.f32 %v1395, %v1628
        %v1639 = vsub.f32 %v1471, %v1631
        %v1640 = vsub.f32 %v1547, %v1634
        %v1641 = vsub.f32 %v1623, %v1637
        %v1642 = vmul.f32 %v1638, 1.442695
        %v1643 = vpow.pop %v1642
        %v1644 = vmul.f32 %v1639, 1.442695
        %v1645 = vpow.pop %v1644
        %v1646 = vmul.f32 %v1640, 1.442695
        %v1647 = vpow.pop %v1646
        %v1648 = vmul.f32 %v1641, 1.442695
        %v1649 = vpow.pop %v1648
        %v1650 = vsel %vm1321, %v1643, 0.0
        %1651 = vadd.xlane.f32.xlu0 %v1650
        %v1652 = vpop.xlane.xlu0 %1651
        %v1653 = vsel %vm1321, %v1645, 0.0
        %1654 = vadd.xlane.f32.xlu0 %v1653
        %v1655 = vpop.xlane.xlu0 %1654
        %v1656 = vsel %vm1321, %v1647, 0.0
        %1657 = vadd.xlane.f32.xlu0 %v1656
        %v1658 = vpop.xlane.xlu0 %1657
        %v1659 = vsel %vm1321, %v1649, 0.0
        %1660 = vadd.xlane.f32.xlu0 %v1659
        %v1661 = vpop.xlane.xlu0 %1660
        %v1662 = vrcp.pop %v1652
        %v1663 = vrcp.pop %v1655
        %v1664 = vrcp.pop %v1658
        %v1665 = vrcp.pop %v1661
        %v1666 = vmul.f32 %v1643, %v1662
        %v1667 = vmul.f32 %v1645, %v1663
        %v1668 = vmul.f32 %v1647, %v1664
        %v1669 = vmul.f32 %v1649, %v1665
        %v1671 = vsel %vm1321, %v1666, 0
        %1673 = vmatprep.subr.mxu0 0.0
        %1674 = vmatpush1.msra.mxu0 %v1317
        %1675 = vmatprep.subr.mxu0 0.0
        %1676 = vmatpush1.msra.mxu0 0.0
        %1677 = vmatprep.subr.mxu0 0.0
        %1678 = vmatpush1.msra.mxu0 0.0
        %1679 = vmatprep.subr.mxu0 0.0
        %1680 = vmatpush1.msra.mxu0 0.0
        %1681 = vmatprep.subr.mxu0 0.0
        %1682 = vmatpush1.msra.mxu0 0.0
        %1683 = vmatprep.subr.mxu0 0.0
        %1684 = vmatpush1.msra.mxu0 0.0
        %1685 = vmatprep.subr.mxu0 0.0
        %1686 = vmatpush1.msra.mxu0 0.0
        %1687 = vmatprep.subr.mxu0 0.0
        %1688 = vmatpush1.msra.mxu0 0.0
        %1689 = vmatprep.subr.mxu0 0.0
        %1690 = vmatpush1.msra.mxu0 0.0
        %1691 = vmatprep.subr.mxu0 0.0
        %1692 = vmatpush1.msra.mxu0 0.0
        %1693 = vmatprep.subr.mxu0 0.0
        %1694 = vmatpush1.msra.mxu0 0.0
        %1695 = vmatprep.subr.mxu0 0.0
        %1696 = vmatpush1.msra.mxu0 0.0
        %1697 = vmatprep.subr.mxu0 0.0
        %1698 = vmatpush1.msra.mxu0 0.0
        %1699 = vmatprep.subr.mxu0 0.0
        %1700 = vmatpush1.msra.mxu0 0.0
        %1701 = vmatprep.subr.mxu0 0.0
        %1702 = vmatpush1.msra.mxu0 0.0
        %1703 = vmatprep.subr.mxu0 0.0
        %1704 = vmatpush1.msra.mxu0 0.0
        %1705 = vmatprep.subr.mxu0 0.0
        %1706 = vmatpush1.msra.mxu0 0.0
        %1707 = vmatprep.subr.mxu0 0.0
        %1708 = vmatpush1.msra.mxu0 0.0
        %1709 = vmatprep.subr.mxu0 0.0
        %1710 = vmatpush1.msra.mxu0 0.0
        %1711 = vmatprep.subr.mxu0 0.0
        %1712 = vmatpush1.msra.mxu0 0.0
        %1713 = vmatprep.subr.mxu0 0.0
        %1714 = vmatpush1.msra.mxu0 0.0
        %1715 = vmatprep.subr.mxu0 0.0
        %1716 = vmatpush1.msra.mxu0 0.0
        %1717 = vmatprep.subr.mxu0 0.0
        %1718 = vmatpush1.msra.mxu0 0.0
        %1719 = vmatprep.subr.mxu0 0.0
        %1720 = vmatpush1.msra.mxu0 0.0
        %1721 = vmatprep.subr.mxu0 0.0
        %1722 = vmatpush1.msra.mxu0 0.0
        %1723 = vmatprep.subr.mxu0 0.0
        %1724 = vmatpush1.msra.mxu0 0.0
        %1725 = vmatprep.subr.mxu0 0.0
        %1726 = vmatpush1.msra.mxu0 0.0
        %1727 = vmatprep.subr.mxu0 0.0
        %1728 = vmatpush1.msra.mxu0 0.0
        %1729 = vmatprep.subr.mxu0 0.0
        %1730 = vmatpush1.msra.mxu0 0.0
        %1731 = vmatprep.subr.mxu0 0.0
        %1732 = vmatpush1.msra.mxu0 0.0
        %1733 = vmatprep.subr.mxu0 0.0
        %1734 = vmatpush1.msra.mxu0 0.0
        %1735 = vmatprep.subr.mxu0 0.0
        %1736 = vmatpush1.msra.mxu0 0.0
        %1737 = vmatprep.mubr.f32.mxu0 0.0
        %1738 = vmatmul.mubr.f32.gmra.mrb[0].mxu0 %v1671
        %v1739 = vpop.f32.mrb[0].mxu0
        %v1740 = vadd.f32 0.0, %v1739
        %v1741 = vpop.f32.mrb[0].mxu0
        %1742 = vdwg.mxu0
        %v1744 = vsel %vm1321, %v1667, 0
        %1746 = vmatprep.subr.mxu0 0.0
        %1747 = vmatpush1.msra.mxu0 %v1318
        %1748 = vmatprep.subr.mxu0 0.0
        %1749 = vmatpush1.msra.mxu0 0.0
        %1750 = vmatprep.subr.mxu0 0.0
        %1751 = vmatpush1.msra.mxu0 0.0
        %1752 = vmatprep.subr.mxu0 0.0
        %1753 = vmatpush1.msra.mxu0 0.0
        %1754 = vmatprep.subr.mxu0 0.0
        %1755 = vmatpush1.msra.mxu0 0.0
        %1756 = vmatprep.subr.mxu0 0.0
        %1757 = vmatpush1.msra.mxu0 0.0
        %1758 = vmatprep.subr.mxu0 0.0
        %1759 = vmatpush1.msra.mxu0 0.0
        %1760 = vmatprep.subr.mxu0 0.0
        %1761 = vmatpush1.msra.mxu0 0.0
        %1762 = vmatprep.subr.mxu0 0.0
        %1763 = vmatpush1.msra.mxu0 0.0
        %1764 = vmatprep.subr.mxu0 0.0
        %1765 = vmatpush1.msra.mxu0 0.0
        %1766 = vmatprep.subr.mxu0 0.0
        %1767 = vmatpush1.msra.mxu0 0.0
        %1768 = vmatprep.subr.mxu0 0.0
        %1769 = vmatpush1.msra.mxu0 0.0
        %1770 = vmatprep.subr.mxu0 0.0
        %1771 = vmatpush1.msra.mxu0 0.0
        %1772 = vmatprep.subr.mxu0 0.0
        %1773 = vmatpush1.msra.mxu0 0.0
        %1774 = vmatprep.subr.mxu0 0.0
        %1775 = vmatpush1.msra.mxu0 0.0
        %1776 = vmatprep.subr.mxu0 0.0
        %1777 = vmatpush1.msra.mxu0 0.0
        %1778 = vmatprep.subr.mxu0 0.0
        %1779 = vmatpush1.msra.mxu0 0.0
        %1780 = vmatprep.subr.mxu0 0.0
        %1781 = vmatpush1.msra.mxu0 0.0
        %1782 = vmatprep.subr.mxu0 0.0
        %1783 = vmatpush1.msra.mxu0 0.0
        %1784 = vmatprep.subr.mxu0 0.0
        %1785 = vmatpush1.msra.mxu0 0.0
        %1786 = vmatprep.subr.mxu0 0.0
        %1787 = vmatpush1.msra.mxu0 0.0
        %1788 = vmatprep.subr.mxu0 0.0
        %1789 = vmatpush1.msra.mxu0 0.0
        %1790 = vmatprep.subr.mxu0 0.0
        %1791 = vmatpush1.msra.mxu0 0.0
        %1792 = vmatprep.subr.mxu0 0.0
        %1793 = vmatpush1.msra.mxu0 0.0
        %1794 = vmatprep.subr.mxu0 0.0
        %1795 = vmatpush1.msra.mxu0 0.0
        %1796 = vmatprep.subr.mxu0 0.0
        %1797 = vmatpush1.msra.mxu0 0.0
        %1798 = vmatprep.subr.mxu0 0.0
        %1799 = vmatpush1.msra.mxu0 0.0
        %1800 = vmatprep.subr.mxu0 0.0
        %1801 = vmatpush1.msra.mxu0 0.0
        %1802 = vmatprep.subr.mxu0 0.0
        %1803 = vmatpush1.msra.mxu0 0.0
        %1804 = vmatprep.subr.mxu0 0.0
        %1805 = vmatpush1.msra.mxu0 0.0
        %1806 = vmatprep.subr.mxu0 0.0
        %1807 = vmatpush1.msra.mxu0 0.0
        %1808 = vmatprep.subr.mxu0 0.0
        %1809 = vmatpush1.msra.mxu0 0.0
        %1810 = vmatprep.mubr.f32.mxu0 0.0
        %1811 = vmatmul.mubr.f32.gmra.mrb[0].mxu0 %v1744
        %v1812 = vpop.f32.mrb[0].mxu0
        %v1813 = vadd.f32 0.0, %v1812
        %v1814 = vpop.f32.mrb[0].mxu0
        %1815 = vdwg.mxu0
        %v1817 = vsel %vm1321, %v1668, 0
        %1819 = vmatprep.subr.mxu0 0.0
        %1820 = vmatpush1.msra.mxu0 %v1319
        %1821 = vmatprep.subr.mxu0 0.0
        %1822 = vmatpush1.msra.mxu0 0.0
        %1823 = vmatprep.subr.mxu0 0.0
        %1824 = vmatpush1.msra.mxu0 0.0
        %1825 = vmatprep.subr.mxu0 0.0
        %1826 = vmatpush1.msra.mxu0 0.0
        %1827 = vmatprep.subr.mxu0 0.0
        %1828 = vmatpush1.msra.mxu0 0.0
        %1829 = vmatprep.subr.mxu0 0.0
        %1830 = vmatpush1.msra.mxu0 0.0
        %1831 = vmatprep.subr.mxu0 0.0
        %1832 = vmatpush1.msra.mxu0 0.0
        %1833 = vmatprep.subr.mxu0 0.0
        %1834 = vmatpush1.msra.mxu0 0.0
        %1835 = vmatprep.subr.mxu0 0.0
        %1836 = vmatpush1.msra.mxu0 0.0
        %1837 = vmatprep.subr.mxu0 0.0
        %1838 = vmatpush1.msra.mxu0 0.0
        %1839 = vmatprep.subr.mxu0 0.0
        %1840 = vmatpush1.msra.mxu0 0.0
        %1841 = vmatprep.subr.mxu0 0.0
        %1842 = vmatpush1.msra.mxu0 0.0
        %1843 = vmatprep.subr.mxu0 0.0
        %1844 = vmatpush1.msra.mxu0 0.0
        %1845 = vmatprep.subr.mxu0 0.0
        %1846 = vmatpush1.msra.mxu0 0.0
        %1847 = vmatprep.subr.mxu0 0.0
        %1848 = vmatpush1.msra.mxu0 0.0
        %1849 = vmatprep.subr.mxu0 0.0
        %1850 = vmatpush1.msra.mxu0 0.0
        %1851 = vmatprep.subr.mxu0 0.0
        %1852 = vmatpush1.msra.mxu0 0.0
        %1853 = vmatprep.subr.mxu0 0.0
        %1854 = vmatpush1.msra.mxu0 0.0
        %1855 = vmatprep.subr.mxu0 0.0
        %1856 = vmatpush1.msra.mxu0 0.0
        %1857 = vmatprep.subr.mxu0 0.0
        %1858 = vmatpush1.msra.mxu0 0.0
        %1859 = vmatprep.subr.mxu0 0.0
        %1860 = vmatpush1.msra.mxu0 0.0
        %1861 = vmatprep.subr.mxu0 0.0
        %1862 = vmatpush1.msra.mxu0 0.0
        %1863 = vmatprep.subr.mxu0 0.0
        %1864 = vmatpush1.msra.mxu0 0.0
        %1865 = vmatprep.subr.mxu0 0.0
        %1866 = vmatpush1.msra.mxu0 0.0
        %1867 = vmatprep.subr.mxu0 0.0
        %1868 = vmatpush1.msra.mxu0 0.0
        %1869 = vmatprep.subr.mxu0 0.0
        %1870 = vmatpush1.msra.mxu0 0.0
        %1871 = vmatprep.subr.mxu0 0.0
        %1872 = vmatpush1.msra.mxu0 0.0
        %1873 = vmatprep.subr.mxu0 0.0
        %1874 = vmatpush1.msra.mxu0 0.0
        %1875 = vmatprep.subr.mxu0 0.0
        %1876 = vmatpush1.msra.mxu0 0.0
        %1877 = vmatprep.subr.mxu0 0.0
        %1878 = vmatpush1.msra.mxu0 0.0
        %1879 = vmatprep.subr.mxu0 0.0
        %1880 = vmatpush1.msra.mxu0 0.0
        %1881 = vmatprep.subr.mxu0 0.0
        %1882 = vmatpush1.msra.mxu0 0.0
        %1883 = vmatprep.mubr.f32.mxu0 0.0
        %1884 = vmatmul.mubr.f32.gmra.mrb[0].mxu0 %v1817
        %v1885 = vpop.f32.mrb[0].mxu0
        %v1886 = vadd.f32 0.0, %v1885
        %v1887 = vpop.f32.mrb[0].mxu0
        %1888 = vdwg.mxu0
        %v1890 = vsel %vm1321, %v1669, 0
        %1892 = vmatprep.subr.mxu0 0.0
        %1893 = vmatpush1.msra.mxu0 %v1320
        %1894 = vmatprep.subr.mxu0 0.0
        %1895 = vmatpush1.msra.mxu0 0.0
        %1896 = vmatprep.subr.mxu0 0.0
        %1897 = vmatpush1.msra.mxu0 0.0
        %1898 = vmatprep.subr.mxu0 0.0
        %1899 = vmatpush1.msra.mxu0 0.0
        %1900 = vmatprep.subr.mxu0 0.0
        %1901 = vmatpush1.msra.mxu0 0.0
        %1902 = vmatprep.subr.mxu0 0.0
        %1903 = vmatpush1.msra.mxu0 0.0
        %1904 = vmatprep.subr.mxu0 0.0
        %1905 = vmatpush1.msra.mxu0 0.0
        %1906 = vmatprep.subr.mxu0 0.0
        %1907 = vmatpush1.msra.mxu0 0.0
        %1908 = vmatprep.subr.mxu0 0.0
        %1909 = vmatpush1.msra.mxu0 0.0
        %1910 = vmatprep.subr.mxu0 0.0
        %1911 = vmatpush1.msra.mxu0 0.0
        %1912 = vmatprep.subr.mxu0 0.0
        %1913 = vmatpush1.msra.mxu0 0.0
        %1914 = vmatprep.subr.mxu0 0.0
        %1915 = vmatpush1.msra.mxu0 0.0
        %1916 = vmatprep.subr.mxu0 0.0
        %1917 = vmatpush1.msra.mxu0 0.0
        %1918 = vmatprep.subr.mxu0 0.0
        %1919 = vmatpush1.msra.mxu0 0.0
        %1920 = vmatprep.subr.mxu0 0.0
        %1921 = vmatpush1.msra.mxu0 0.0
        %1922 = vmatprep.subr.mxu0 0.0
        %1923 = vmatpush1.msra.mxu0 0.0
        %1924 = vmatprep.subr.mxu0 0.0
        %1925 = vmatpush1.msra.mxu0 0.0
        %1926 = vmatprep.subr.mxu0 0.0
        %1927 = vmatpush1.msra.mxu0 0.0
        %1928 = vmatprep.subr.mxu0 0.0
        %1929 = vmatpush1.msra.mxu0 0.0
        %1930 = vmatprep.subr.mxu0 0.0
        %1931 = vmatpush1.msra.mxu0 0.0
        %1932 = vmatprep.subr.mxu0 0.0
        %1933 = vmatpush1.msra.mxu0 0.0
        %1934 = vmatprep.subr.mxu0 0.0
        %1935 = vmatpush1.msra.mxu0 0.0
        %1936 = vmatprep.subr.mxu0 0.0
        %1937 = vmatpush1.msra.mxu0 0.0
        %1938 = vmatprep.subr.mxu0 0.0
        %1939 = vmatpush1.msra.mxu0 0.0
        %1940 = vmatprep.subr.mxu0 0.0
        %1941 = vmatpush1.msra.mxu0 0.0
        %1942 = vmatprep.subr.mxu0 0.0
        %1943 = vmatpush1.msra.mxu0 0.0
        %1944 = vmatprep.subr.mxu0 0.0
        %1945 = vmatpush1.msra.mxu0 0.0
        %1946 = vmatprep.subr.mxu0 0.0
        %1947 = vmatpush1.msra.mxu0 0.0
        %1948 = vmatprep.subr.mxu0 0.0
        %1949 = vmatpush1.msra.mxu0 0.0
        %1950 = vmatprep.subr.mxu0 0.0
        %1951 = vmatpush1.msra.mxu0 0.0
        %1952 = vmatprep.subr.mxu0 0.0
        %1953 = vmatpush1.msra.mxu0 0.0
        %1954 = vmatprep.subr.mxu0 0.0
        %1955 = vmatpush1.msra.mxu0 0.0
        %1956 = vmatprep.mubr.f32.mxu0 0.0
        %1957 = vmatmul.mubr.f32.gmra.mrb[0].mxu0 %v1890
        %v1958 = vpop.f32.mrb[0].mxu0
        %v1959 = vadd.f32 0.0, %v1958
        %v1960 = vpop.f32.mrb[0].mxu0
        %1961 = vdwg.mxu0
        %v1962 = vcombine.low %v1740, %v1886
        %v1963 = vcombine.high %v1740, %v1886
        %v1965 = vunpack.c.l.s4 1983009808
        %v1966 = vunpack.c.0.s8 %v1965
        %v1967 = vlaneseq
        %v1968 = vshrl.u32 %v1967, 7
        %v1969 = vsub.s32 %v1966, %v1968
        %v1970 = vrot.slane %v1962, %v1969
        %v1972 = vunpack.c.l.s4 1983009808
        %v1973 = vunpack.c.0.s8 %v1972
        %v1974 = vlaneseq
        %v1975 = vshrl.u32 %v1974, 7
        %v1976 = vsub.s32 %v1973, %v1975
        %v1977 = vrot.slane %v1963, %v1976
        %v1978 = vcombine.low %v1813, %v1959
        %v1979 = vcombine.high %v1813, %v1959
        %v1981 = vunpack.c.l.s4 1983009808
        %v1982 = vunpack.c.0.s8 %v1981
        %v1983 = vlaneseq
        %v1984 = vshrl.u32 %v1983, 7
        %v1985 = vsub.s32 %v1982, %v1984
        %v1986 = vrot.slane %v1978, %v1985
        %v1988 = vunpack.c.l.s4 1983009808
        %v1989 = vunpack.c.0.s8 %v1988
        %v1990 = vlaneseq
        %v1991 = vshrl.u32 %v1990, 7
        %v1992 = vsub.s32 %v1989, %v1991
        %v1993 = vrot.slane %v1979, %v1992
        %v1994 = vcombine.low %v1970, %v1986
        %v1995 = vcombine.high %v1970, %v1986
        %v1997 = vunpack.c.l.s4 1934713408
        %v1998 = vunpack.c.0.s8 %v1997
        %v1999 = vlaneseq
        %v2000 = vshrl.u32 %v1999, 7
        %v2001 = vsub.s32 %v1998, %v2000
        %v2002 = vrot.slane %v1994, %v2001
        %v2004 = vunpack.c.l.s4 1934713408
        %v2005 = vunpack.c.0.s8 %v2004
        %v2006 = vlaneseq
        %v2007 = vshrl.u32 %v2006, 7
        %v2008 = vsub.s32 %v2005, %v2007
        %v2009 = vrot.slane %v1995, %v2008
        %v2010 = vcombine.low %v1977, %v1993
        %v2011 = vcombine.high %v1977, %v1993
        %v2013 = vunpack.c.l.s4 1934713408
        %v2014 = vunpack.c.0.s8 %v2013
        %v2015 = vlaneseq
        %v2016 = vshrl.u32 %v2015, 7
        %v2017 = vsub.s32 %v2014, %v2016
        %v2018 = vrot.slane %v2010, %v2017
        %v2020 = vunpack.c.l.s4 1934713408
        %v2021 = vunpack.c.0.s8 %v2020
        %v2022 = vlaneseq
        %v2023 = vshrl.u32 %v2022, 7
        %v2024 = vsub.s32 %v2021, %v2023
        %v2025 = vrot.slane %v2011, %v2024
        %v2026 = vcombine.high %v2002, 0.0
        %v2027 = vcombine.high %v2009, 0.0
        %v2028 = vcombine.high %v2018, 0.0
        %v2029 = vcombine.high %v2025, 0.0
        %v2030 = vcombine.low %v2002, %v2009
        %v2032 = vunpack.c.l.s4 1983009808
        %v2033 = vunpack.c.0.s8 %v2032
        %v2034 = vlaneseq
        %v2035 = vshrl.u32 %v2034, 7
        %v2036 = vsub.s32 %v2033, %v2035
        %v2037 = vrot.slane %v2030, %v2036
        %v2038 = vcombine.low %v2026, %v2027
        %v2040 = vunpack.c.l.s4 1983009808
        %v2041 = vunpack.c.0.s8 %v2040
        %v2042 = vlaneseq
        %v2043 = vshrl.u32 %v2042, 7
        %v2044 = vsub.s32 %v2041, %v2043
        %v2045 = vrot.slane %v2038, %v2044
        %v2046 = vcombine.low %v2018, %v2025
        %v2048 = vunpack.c.l.s4 1983009808
        %v2049 = vunpack.c.0.s8 %v2048
        %v2050 = vlaneseq
        %v2051 = vshrl.u32 %v2050, 7
        %v2052 = vsub.s32 %v2049, %v2051
        %v2053 = vrot.slane %v2046, %v2052
        %v2054 = vcombine.low %v2028, %v2029
        %v2056 = vunpack.c.l.s4 1983009808
        %v2057 = vunpack.c.0.s8 %v2056
        %v2058 = vlaneseq
        %v2059 = vshrl.u32 %v2058, 7
        %v2060 = vsub.s32 %v2057, %v2059
        %v2061 = vrot.slane %v2054, %v2060
        %v2062 = vcombine.low %v2037, %v2045
        %v2063 = vcombine.high %v2037, %v2045
        %v2065 = vunpack.c.l.s4 1934713408
        %v2066 = vunpack.c.0.s8 %v2065
        %v2067 = vlaneseq
        %v2068 = vshrl.u32 %v2067, 7
        %v2069 = vsub.s32 %v2066, %v2068
        %v2070 = vrot.slane %v2062, %v2069
        %v2072 = vunpack.c.l.s4 1934713408
        %v2073 = vunpack.c.0.s8 %v2072
        %v2074 = vlaneseq
        %v2075 = vshrl.u32 %v2074, 7
        %v2076 = vsub.s32 %v2073, %v2075
        %v2077 = vrot.slane %v2063, %v2076
        %v2078 = vcombine.low %v2053, %v2061
        %v2079 = vcombine.high %v2053, %v2061
        %v2081 = vunpack.c.l.s4 1934713408
        %v2082 = vunpack.c.0.s8 %v2081
        %v2083 = vlaneseq
        %v2084 = vshrl.u32 %v2083, 7
        %v2085 = vsub.s32 %v2082, %v2084
        %v2086 = vrot.slane %v2078, %v2085
        %v2088 = vunpack.c.l.s4 1934713408
        %v2089 = vunpack.c.0.s8 %v2088
        %v2090 = vlaneseq
        %v2091 = vshrl.u32 %v2090, 7
        %v2092 = vsub.s32 %v2089, %v2091
        %v2093 = vrot.slane %v2079, %v2092
        %v2094 = vcombine.low %v2070, %v2086
        %v2095 = vcombine.high %v2070, %v2086
        %v2096 = vcombine.low %v2077, %v2093
        %v2097 = vcombine.high %v2077, %v2093
        %2099 = vrot.lane.b32.xlu0 %v2095, 8
        %v2100 = vpop.permute.xlu0 %2099
        %2103 = vrot.lane.b32.xlu0 %v2096, 16
        %v2104 = vpop.permute.xlu0 %2103
        %2107 = vrot.lane.b32.xlu0 %v2097, 24
        %v2108 = vpop.permute.xlu0 %2107
        %v2110 = vsel %vm1321, %v2094, %v2100
        %vm2111 = vcmask 130048
        %v2112 = vsel %vm2111, %v2110, %v2104
        %vm2113 = vcmask 195584
        %v2114 = vsel %vm2113, %v2112, %v2108
        %v2115 = vld [vmem:[%s728] sm:$0xff]
        %v2116 = vld [vmem:[%s728 + $0x8] sm:$0xff]
        %v2117 = vld [vmem:[%s728 + $0x10] sm:$0xff]
        %v2118 = vld [vmem:[%s728 + $0x18] sm:$0xff]
        %v2119 = vld [vmem:[%s731] sm:$0x1]
        %v2121 = vlaneseq
        %v2122 = vshrl.u32 %v2121, 7
        %v2123 = vsub.s32 0, %v2122
        %v2124 = vrot.slane %v2119, %v2123
        %v2127 = vsel %vm766, %v2114, 0
        %2129 = vmatprep.subr.mxu0 0.0
        %2130 = vmatpush1.msra.mxu0 %v2115
        %2131 = vmatprep.subr.mxu0 0.0
        %2132 = vmatpush1.msra.mxu0 %v2116
        %2133 = vmatprep.subr.mxu0 0.0
        %2134 = vmatpush1.msra.mxu0 %v2117
        %2135 = vmatprep.subr.mxu0 0.0
        %2136 = vmatpush1.msra.mxu0 %v2118
        %2137 = vmatprep.subr.mxu0 0.0
        %2138 = vmatpush1.msra.mxu0 0.0
        %2139 = vmatprep.subr.mxu0 0.0
        %2140 = vmatpush1.msra.mxu0 0.0
        %2141 = vmatprep.subr.mxu0 0.0
        %2142 = vmatpush1.msra.mxu0 0.0
        %2143 = vmatprep.subr.mxu0 0.0
        %2144 = vmatpush1.msra.mxu0 0.0
        %2145 = vmatprep.subr.mxu0 0.0
        %2146 = vmatpush1.msra.mxu0 0.0
        %2147 = vmatprep.subr.mxu0 0.0
        %2148 = vmatpush1.msra.mxu0 0.0
        %2149 = vmatprep.subr.mxu0 0.0
        %2150 = vmatpush1.msra.mxu0 0.0
        %2151 = vmatprep.subr.mxu0 0.0
        %2152 = vmatpush1.msra.mxu0 0.0
        %2153 = vmatprep.subr.mxu0 0.0
        %2154 = vmatpush1.msra.mxu0 0.0
        %2155 = vmatprep.subr.mxu0 0.0
        %2156 = vmatpush1.msra.mxu0 0.0
        %2157 = vmatprep.subr.mxu0 0.0
        %2158 = vmatpush1.msra.mxu0 0.0
        %2159 = vmatprep.subr.mxu0 0.0
        %2160 = vmatpush1.msra.mxu0 0.0
        %2161 = vmatprep.subr.mxu0 0.0
        %2162 = vmatpush1.msra.mxu0 0.0
        %2163 = vmatprep.subr.mxu0 0.0
        %2164 = vmatpush1.msra.mxu0 0.0
        %2165 = vmatprep.subr.mxu0 0.0
        %2166 = vmatpush1.msra.mxu0 0.0
        %2167 = vmatprep.subr.mxu0 0.0
        %2168 = vmatpush1.msra.mxu0 0.0
        %2169 = vmatprep.subr.mxu0 0.0
        %2170 = vmatpush1.msra.mxu0 0.0
        %2171 = vmatprep.subr.mxu0 0.0
        %2172 = vmatpush1.msra.mxu0 0.0
        %2173 = vmatprep.subr.mxu0 0.0
        %2174 = vmatpush1.msra.mxu0 0.0
        %2175 = vmatprep.subr.mxu0 0.0
        %2176 = vmatpush1.msra.mxu0 0.0
        %2177 = vmatprep.subr.mxu0 0.0
        %2178 = vmatpush1.msra.mxu0 0.0
        %2179 = vmatprep.subr.mxu0 0.0
        %2180 = vmatpush1.msra.mxu0 0.0
        %2181 = vmatprep.subr.mxu0 0.0
        %2182 = vmatpush1.msra.mxu0 0.0
        %2183 = vmatprep.subr.mxu0 0.0
        %2184 = vmatpush1.msra.mxu0 0.0
        %2185 = vmatprep.subr.mxu0 0.0
        %2186 = vmatpush1.msra.mxu0 0.0
        %2187 = vmatprep.subr.mxu0 0.0
        %2188 = vmatpush1.msra.mxu0 0.0
        %2189 = vmatprep.subr.mxu0 0.0
        %2190 = vmatpush1.msra.mxu0 0.0
        %2191 = vmatprep.subr.mxu0 0.0
        %2192 = vmatpush1.msra.mxu0 0.0
        %2193 = vmatprep.mubr.f32.mxu0 0.0
        %2194 = vmatmul.mubr.f32.gmra.mrb[0].mxu0 %v2127
        %v2195 = vpop.f32.mrb[0].mxu0
        %v2196 = vadd.f32 %v2124, %v2195
        %v2197 = vpop.f32.mrb[0].mxu0
        %2198 = vdwg.mxu0
        %v2199 = vadd.f32 %v763, %v2196
        %v2200 = vld [vmem:[%s734] sm:$0x1]
        %v2201 = vld [vmem:[%s737] sm:$0x1]
        %v2202 = vsel %vm766, %v2199, 0.0
        %2203 = vadd.xlane.f32.xlu0 %v2202
        %v2204 = vpop.xlane.xlu0 %2203
        %v2205 = vmul.f32 %v2204, %v770
        %v2206 = vsub.f32 %v2199, %v2205
        %v2207 = vmul.f32 %v2206, %v2206
        %v2208 = vsel %vm766, %v2207, 0.0
        %2209 = vadd.xlane.f32.xlu0 %v2208
        %v2210 = vpop.xlane.xlu0 %2209
        %v2211 = vmul.f32 %v2210, %v770
        %v2212 = vadd.f32 %v2211, 1e-06
        %v2213 = vrsqrt.pop %v2212
        %v2214 = vmul.f32 %v2206, %v2213
        %v2216 = vlaneseq
        %v2217 = vshrl.u32 %v2216, 7
        %v2218 = vsub.s32 0, %v2217
        %v2219 = vrot.slane %v2200, %v2218
        %v2221 = vmul.f32 %v2214, %v2219
        %v2223 = vlaneseq
        %v2224 = vshrl.u32 %v2223, 7
        %v2225 = vsub.s32 0, %v2224
        %v2226 = vrot.slane %v2201, %v2225
        %v2228 = vadd.f32 %v2221, %v2226
        %v2229 = vld [vmem:[%s742] sm:$0xff]
        %v2230 = vld [vmem:[%s742 + $0x8] sm:$0xff]
        %v2231 = vld [vmem:[%s742 + $0x10] sm:$0xff]
        %v2232 = vld [vmem:[%s742 + $0x18] sm:$0xff]
        %v2233 = vld [vmem:[%s745] sm:$0x1]
        %v2235 = vlaneseq
        %v2236 = vshrl.u32 %v2235, 7
        %v2237 = vsub.s32 0, %v2236
        %v2238 = vrot.slane %v2233, %v2237
        %v2241 = vsel %vm766, %v2228, 0
        %2243 = vmatprep.subr.mxu0 0.0
        %2244 = vmatpush1.msra.mxu0 %v2229
        %2245 = vmatprep.subr.mxu0 0.0
        %2246 = vmatpush1.msra.mxu0 %v2230
        %2247 = vmatprep.subr.mxu0 0.0
        %2248 = vmatpush1.msra.mxu0 %v2231
        %2249 = vmatprep.subr.mxu0 0.0
        %2250 = vmatpush1.msra.mxu0 %v2232
        %2251 = vmatprep.subr.mxu0 0.0
        %2252 = vmatpush1.msra.mxu0 0.0
        %2253 = vmatprep.subr.mxu0 0.0
        %2254 = vmatpush1.msra.mxu0 0.0
        %2255 = vmatprep.subr.mxu0 0.0
        %2256 = vmatpush1.msra.mxu0 0.0
        %2257 = vmatprep.subr.mxu0 0.0
        %2258 = vmatpush1.msra.mxu0 0.0
        %2259 = vmatprep.subr.mxu0 0.0
        %2260 = vmatpush1.msra.mxu0 0.0
        %2261 = vmatprep.subr.mxu0 0.0
        %2262 = vmatpush1.msra.mxu0 0.0
        %2263 = vmatprep.subr.mxu0 0.0
        %2264 = vmatpush1.msra.mxu0 0.0
        %2265 = vmatprep.subr.mxu0 0.0
        %2266 = vmatpush1.msra.mxu0 0.0
        %2267 = vmatprep.subr.mxu0 0.0
        %2268 = vmatpush1.msra.mxu0 0.0
        %2269 = vmatprep.subr.mxu0 0.0
        %2270 = vmatpush1.msra.mxu0 0.0
        %2271 = vmatprep.subr.mxu0 0.0
        %2272 = vmatpush1.msra.mxu0 0.0
        %2273 = vmatprep.subr.mxu0 0.0
        %2274 = vmatpush1.msra.mxu0 0.0
        %2275 = vmatprep.subr.mxu0 0.0
        %2276 = vmatpush1.msra.mxu0 0.0
        %2277 = vmatprep.subr.mxu0 0.0
        %2278 = vmatpush1.msra.mxu0 0.0
        %2279 = vmatprep.subr.mxu0 0.0
        %2280 = vmatpush1.msra.mxu0 0.0
        %2281 = vmatprep.subr.mxu0 0.0
        %2282 = vmatpush1.msra.mxu0 0.0
        %2283 = vmatprep.subr.mxu0 0.0
        %2284 = vmatpush1.msra.mxu0 0.0
        %2285 = vmatprep.subr.mxu0 0.0
        %2286 = vmatpush1.msra.mxu0 0.0
        %2287 = vmatprep.subr.mxu0 0.0
        %2288 = vmatpush1.msra.mxu0 0.0
        %2289 = vmatprep.subr.mxu0 0.0
        %2290 = vmatpush1.msra.mxu0 0.0
        %2291 = vmatprep.subr.mxu0 0.0
        %2292 = vmatpush1.msra.mxu0 0.0
        %2293 = vmatprep.subr.mxu0 0.0
        %2294 = vmatpush1.msra.mxu0 0.0
        %2295 = vmatprep.subr.mxu0 0.0
        %2296 = vmatpush1.msra.mxu0 0.0
        %2297 = vmatprep.subr.mxu0 0.0
        %2298 = vmatpush1.msra.mxu0 0.0
        %2299 = vmatprep.subr.mxu0 0.0
        %2300 = vmatpush1.msra.mxu0 0.0
        %2301 = vmatprep.subr.mxu0 0.0
        %2302 = vmatpush1.msra.mxu0 0.0
        %2303 = vmatprep.subr.mxu0 0.0
        %2304 = vmatpush1.msra.mxu0 0.0
        %2305 = vmatprep.subr.mxu0 0.0
        %2306 = vmatpush1.msra.mxu0 0.0
        %2307 = vmatprep.mubr.f32.mxu0 0.0
        %2308 = vmatmul.mubr.f32.gmra.mrb[0].mxu0 %v2241
        %v2309 = vpop.f32.mrb[0].mxu0
        %v2310 = vadd.f32 %v2238, %v2309
        %v2311 = vpop.f32.mrb[0].mxu0
        %2312 = vdwg.mxu0
        %v2313 = vmul.f32 %v2310, 0.5
        %v2314 = vmul.f32 %v2310, 0.70710677
        %v2315 = verf.f32.pop %v2314
        %v2316 = vadd.f32 %v2315, 1.0
        %v2317 = vmul.f32 %v2313, %v2316
        %v2318 = vld [vmem:[%s750] sm:$0xff]
        %v2319 = vld [vmem:[%s750 + $0x8] sm:$0xff]
        %v2320 = vld [vmem:[%s750 + $0x10] sm:$0xff]
        %v2321 = vld [vmem:[%s750 + $0x18] sm:$0xff]
        %v2322 = vld [vmem:[%s750 + $0x20] sm:$0xff]
        %v2323 = vld [vmem:[%s750 + $0x28] sm:$0xff]
        %v2324 = vld [vmem:[%s750 + $0x30] sm:$0xff]
        %v2325 = vld [vmem:[%s750 + $0x38] sm:$0xff]
        %v2326 = vld [vmem:[%s753] sm:$0x1]
        %v2328 = vlaneseq
        %v2329 = vshrl.u32 %v2328, 7
        %v2330 = vsub.s32 0, %v2329
        %v2331 = vrot.slane %v2326, %v2330
        %vm2333 = vcmask 523264
        %v2335 = vsel %vm2333, %v2317, 0
        %2337 = vmatprep.subr.mxu0 0.0
        %2338 = vmatpush1.msra.mxu0 %v2318
        %2339 = vmatprep.subr.mxu0 0.0
        %2340 = vmatpush1.msra.mxu0 %v2319
        %2341 = vmatprep.subr.mxu0 0.0
        %2342 = vmatpush1.msra.mxu0 %v2320
        %2343 = vmatprep.subr.mxu0 0.0
        %2344 = vmatpush1.msra.mxu0 %v2321
        %2345 = vmatprep.subr.mxu0 0.0
        %2346 = vmatpush1.msra.mxu0 %v2322
        %2347 = vmatprep.subr.mxu0 0.0
        %2348 = vmatpush1.msra.mxu0 %v2323
        %2349 = vmatprep.subr.mxu0 0.0
        %2350 = vmatpush1.msra.mxu0 %v2324
        %2351 = vmatprep.subr.mxu0 0.0
        %2352 = vmatpush1.msra.mxu0 %v2325
        %2353 = vmatprep.subr.mxu0 0.0
        %2354 = vmatpush1.msra.mxu0 0.0
        %2355 = vmatprep.subr.mxu0 0.0
        %2356 = vmatpush1.msra.mxu0 0.0
        %2357 = vmatprep.subr.mxu0 0.0
        %2358 = vmatpush1.msra.mxu0 0.0
        %2359 = vmatprep.subr.mxu0 0.0
        %2360 = vmatpush1.msra.mxu0 0.0
        %2361 = vmatprep.subr.mxu0 0.0
        %2362 = vmatpush1.msra.mxu0 0.0
        %2363 = vmatprep.subr.mxu0 0.0
        %2364 = vmatpush1.msra.mxu0 0.0
        %2365 = vmatprep.subr.mxu0 0.0
        %2366 = vmatpush1.msra.mxu0 0.0
        %2367 = vmatprep.subr.mxu0 0.0
        %2368 = vmatpush1.msra.mxu0 0.0
        %2369 = vmatprep.subr.mxu0 0.0
        %2370 = vmatpush1.msra.mxu0 0.0
        %2371 = vmatprep.subr.mxu0 0.0
        %2372 = vmatpush1.msra.mxu0 0.0
        %2373 = vmatprep.subr.mxu0 0.0
        %2374 = vmatpush1.msra.mxu0 0.0
        %2375 = vmatprep.subr.mxu0 0.0
        %2376 = vmatpush1.msra.mxu0 0.0
        %2377 = vmatprep.subr.mxu0 0.0
        %2378 = vmatpush1.msra.mxu0 0.0
        %2379 = vmatprep.subr.mxu0 0.0
        %2380 = vmatpush1.msra.mxu0 0.0
        %2381 = vmatprep.subr.mxu0 0.0
        %2382 = vmatpush1.msra.mxu0 0.0
        %2383 = vmatprep.subr.mxu0 0.0
        %2384 = vmatpush1.msra.mxu0 0.0
        %2385 = vmatprep.subr.mxu0 0.0
        %2386 = vmatpush1.msra.mxu0 0.0
        %2387 = vmatprep.subr.mxu0 0.0
        %2388 = vmatpush1.msra.mxu0 0.0
        %2389 = vmatprep.subr.mxu0 0.0
        %2390 = vmatpush1.msra.mxu0 0.0
        %2391 = vmatprep.subr.mxu0 0.0
        %2392 = vmatpush1.msra.mxu0 0.0
        %2393 = vmatprep.subr.mxu0 0.0
        %2394 = vmatpush1.msra.mxu0 0.0
        %2395 = vmatprep.subr.mxu0 0.0
        %2396 = vmatpush1.msra.mxu0 0.0
        %2397 = vmatprep.subr.mxu0 0.0
        %2398 = vmatpush1.msra.mxu0 0.0
        %2399 = vmatprep.subr.mxu0 0.0
        %2400 = vmatpush1.msra.mxu0 0.0
        %2401 = vmatprep.mubr.f32.mxu0 0.0
        %2402 = vmatmul.mubr.f32.gmra.mrb[0].mxu0 %v2335
        %v2403 = vpop.f32.mrb[0].mxu0
        %v2404 = vadd.f32 %v2331, %v2403
        %v2405 = vpop.f32.mrb[0].mxu0
        %2406 = vdwg.mxu0
        %v2407 = vadd.f32 %v2199, %v2404
        %2408 = vst.msk [vmem:[#allocation2] sm:$0xff] %vm766, %v2407
        %p2409 = scmp.eq.s32.totalorder %s39, 1
        // Predicated region
        $region97: #{tpu_custom_call.1} parent=83 // pred_check
          %p2410 = pneg %p2409
        $region98: #{tpu_custom_call.1} parent=83 // pred_check_branch
          %2412 = sbr.rel (%p2410) target = $region100
        $region99: #{tpu_custom_call.1} parent=83 // pred_region
          %v2413 = vld [vmem:[%s14] sm:$0x1]
          %v2414 = vld [vmem:[%s15] sm:$0x1]
          %v2415 = vsel %vm766, %v2407, 0.0
          %2416 = vadd.xlane.f32.xlu0 %v2415
          %v2417 = vpop.xlane.xlu0 %2416
          %v2418 = vmul.f32 %v2417, %v770
          %v2419 = vsub.f32 %v2407, %v2418
          %v2420 = vmul.f32 %v2419, %v2419
          %v2421 = vsel %vm766, %v2420, 0.0
          %2422 = vadd.xlane.f32.xlu0 %v2421
          %v2423 = vpop.xlane.xlu0 %2422
          %v2424 = vmul.f32 %v2423, %v770
          %v2425 = vadd.f32 %v2424, 1e-06
          %v2426 = vrsqrt.pop %v2425
          %v2427 = vmul.f32 %v2419, %v2426
          %v2429 = vlaneseq
          %v2430 = vshrl.u32 %v2429, 7
          %v2431 = vsub.s32 0, %v2430
          %v2432 = vrot.slane %v2413, %v2431
          %v2434 = vmul.f32 %v2427, %v2432
          %v2436 = vlaneseq
          %v2437 = vshrl.u32 %v2436, 7
          %v2438 = vsub.s32 0, %v2437
          %v2439 = vrot.slane %v2414, %v2438
          %v2441 = vadd.f32 %v2434, %v2439
          %2442 = vst.msk [vmem:[%s709] sm:$0xff] %vm766, %v2441
        $region100: #{tpu_custom_call.1} parent=83 // pred_fallthru
          _
        %s2443 = sand.u32 %s455, 1
        %s2444 = scalar_lea.sflag [#allocation5], %s2443
        %s2445 = sand.u32 %s455, 1
        %s2446 = smul.addr %s2445, 8
        %s2447 = scalar_lea.vmem [#allocation8], %s2446
        // Predicated region
        $region101: #{tpu_custom_call.1} parent=83 // pred_check
          %p2448 = pneg %p465
        $region102: #{tpu_custom_call.1} parent=83 // pred_check_branch
          %2450 = sbr.rel (%p2448) target = $region104
        $region103: #{tpu_custom_call.1} parent=83 // pred_region
          %s2452 = ssub.s32 128, 128
          %2453 = vsyncadd %s2444, %s2452
          %s2454 = smul.addr %s38, 128
          %s2455 = scalar_lea.hbm %s16, %s2454
          %s2457 = sshll.u32 %s2447, 4
          %s2458 = int_to_ptr.vmem [resolvable:$true] %s2457
          %2460 = dma.vmem_to_hbm [thread:$0]  %s2458, 128, %s2455, %s2444
        $region104: #{tpu_custom_call.1} parent=83 // pred_fallthru
          _
      $region84: #{tpu_custom_call.1} parent=5 // pred_fallthru
        _
      %p2461 = scmp.le.s32.totalorder 2, %s29
      // Predicated region
      $region105: #{tpu_custom_call.1} parent=5 // pred_check
        %p2462 = pneg %p2461
      $region106: #{tpu_custom_call.1} parent=5 // pred_check_branch
        %2464 = sbr.rel (%p2462) target = $region108
      $region107: #{tpu_custom_call.1} parent=5 // pred_region
        %s2465 = ssub.s32 %s29, 2
        // Predicated region
        $region109: #{tpu_custom_call.1} parent=107 // pred_check
          %p2466 = pneg %p471
        $region110: #{tpu_custom_call.1} parent=107 // pred_check_branch
          %2468 = sbr.rel (%p2466) target = $region112
        $region111: #{tpu_custom_call.1} parent=107 // pred_region
          %s2469 = sand.u32 %s456, 1
          %s2470 = scalar_lea.sflag [#allocation5], %s2469
          %s2471 = sand.u32 %s456, 1
          %s2472 = smul.addr %s2471, 8
          %s2473 = scalar_lea.vmem [#allocation8], %s2472
          %2474 = dma.done %s2470, 128
        $region112: #{tpu_custom_call.1} parent=107 // pred_fallthru
          _
      $region108: #{tpu_custom_call.1} parent=5 // pred_fallthru
        _
    $region6: #{tpu_custom_call.1} parent=1 // loop_footer
      %s33 = sadd.s32 1, %s29
    $region7: #{tpu_custom_call.1} parent=1 // loop_footer_branch
      %28 = sbr.rel target = $region3
    $region8: #{tpu_custom_call.1} parent=1 // loop_exit
      _
    %2475 = vsyncpa [#allocation4], 1
    %s2476 = scalar_lea.sflag [#allocation4], 1
    %2477 = vsyncpa %s2476, 1
    %2478 = vsyncpa [#allocation7], 1
    %2479 = vsyncpa [#allocation5], 1
    %s2480 = scalar_lea.sflag [#allocation5], 1
    %2481 = vsyncpa %s2480, 1

</llo_original>
